<compile_context>
chip_gen: v7x
topology: tpu7x:2x2x1
jax: 0.10.0
libtpu: 0.0.40
codegen_flags: <defaults>
</compile_context>

<pallas_src>
import jax
import jax.numpy as jnp
from jax.experimental import pallas as pl
from jax.experimental.pallas import tpu as pltpu


def se_gate_kernel(se_ref, w_ref, b_ref, feat_ref, out_ref):
    # Row-oriented 1x1 conv on the MXU: (1, Cin) · (Cout_tile, Cin)^T, contracting
    # both operands on their last (Cin) dim (trans_b) -> dense (1, Cout_tile) row,
    # f32 accumulation. No weight transpose in the wrapper or the kernel body.
    z = jax.lax.dot_general(
        se_ref[...], w_ref[...],
        dimension_numbers=(((1,), (1,)), ((), ())),
        preferred_element_type=jnp.float32,
    )                                                         # (1, Cout_tile) f32
    # Bias add + sigmoid on ~9 dense vregs (EUP transcendental in f32).
    gate_row = jax.nn.sigmoid(z + b_ref[...].astype(jnp.float32))
    # Single relayout: dense row -> per-channel column for the lane broadcast.
    gate_col = jnp.transpose(gate_row, (1, 0)).astype(feat_ref.dtype)  # (Cout_tile, 1)
    # Multiply in the feature dtype (no f32 upcast of the big (Cout_tile, HW) tile).
    out_ref[...] = (feat_ref[...] * gate_col).astype(out_ref.dtype)


def se_conv_sigmoid_mul(x_se, feat, weight, bias, *, cout_tile=1152):
    """x_se: (1, Cin, 1, 1); feat: (1, Cout, H, W); weight: (Cout, Cin, 1, 1); bias: (Cout,)."""
    N, Cin, _, _ = x_se.shape
    Nf, Cout, H, W = feat.shape
    assert N == 1 and Nf == 1, "module is defined for batch size 1"
    assert Cout % cout_tile == 0 and cout_tile % 128 == 0
    HW = H * W
    n_blocks = Cout // cout_tile

    # All of these are free row-major reshapes — no transposes, no copies, no casts.
    se_row = x_se.reshape(1, Cin)          # (1, 96)       SE vector as a lane row
    w2d = weight.reshape(Cout, Cin)        # (2304, 96)    native OIHW layout
    b_row = bias.reshape(1, Cout)          # (1, 2304)     lane-dense bias row
    feat2d = feat.reshape(Cout, HW)        # (2304, 49)    native NCHW layout

    itemsize = jnp.dtype(feat.dtype).itemsize

    grid_spec = pltpu.PrefetchScalarGridSpec(
        num_scalar_prefetch=0,
        grid=(n_blocks,),
        in_specs=[
            pl.BlockSpec((1, Cin), lambda j: (0, 0)),          # se row (resident)
            pl.BlockSpec((cout_tile, Cin), lambda j: (j, 0)),  # weight tile
            pl.BlockSpec((1, cout_tile), lambda j: (0, j)),    # bias row slice (contiguous DMA)
            pl.BlockSpec((cout_tile, HW), lambda j: (j, 0)),   # feature tile
        ],
        out_specs=pl.BlockSpec((cout_tile, HW), lambda j: (j, 0)),
    )

    cost = pl.CostEstimate(
        flops=2 * Cout * Cin,
        transcendentals=Cout,
        bytes_accessed=(
            Cout * Cin * jnp.dtype(weight.dtype).itemsize   # weight
            + Cout * HW * itemsize                          # feat in
            + Cout * HW * itemsize                          # out
            + Cin * jnp.dtype(x_se.dtype).itemsize          # se
            + Cout * jnp.dtype(bias.dtype).itemsize         # bias
        ),
    )

    out2d = pl.pallas_call(
        se_gate_kernel,
        out_shape=jax.ShapeDtypeStruct((Cout, HW), feat.dtype),
        grid_spec=grid_spec,
        compiler_params=pltpu.CompilerParams(
            # v7x: intended to shard the 2 Cout blocks across the 2 TensorCores.
            dimension_semantics=("parallel",),
        ),
        cost_estimate=cost,
    )(se_row, w2d, b_row, feat2d)

    # Free reshape back to NCHW to match the PyTorch output convention.
    return out2d.reshape(N, Cout, H, W)


if __name__ == "__main__":
    Cin, Cout, H, W = 96, 2304, 7, 7

    key = jax.random.PRNGKey(0)
    k1, k2, k3, k4 = jax.random.split(key, 4)

    # Deterministic synthetic inputs / parameters (shapes match the PyTorch module).
    x776 = jax.random.normal(k1, (1, Cin, 1, 1), dtype=jnp.float32)       # SE input
    x773 = jax.random.normal(k2, (1, Cout, H, W), dtype=jnp.float32)      # feature map
    # Conv2d(96, 2304, 1x1) parameters, PyTorch OIHW layout, deterministic init.
    bound = 1.0 / (Cin ** 0.5)
    weight = jax.random.uniform(k3, (Cout, Cin, 1, 1), jnp.float32, -bound, bound)
    bias = jax.random.uniform(k4, (Cout,), jnp.float32, -bound, bound)

    out = se_conv_sigmoid_mul(x776, x773, weight, bias)
    out = jax.block_until_ready(out)

    # Reference check in plain JAX (same math as the PyTorch module).
    gate_ref = jax.nn.sigmoid(
        jnp.einsum("oi,i->o", weight.reshape(Cout, Cin), x776.reshape(Cin)) + bias
    ).reshape(1, Cout, 1, 1)
    ref = gate_ref * x773
    assert out.shape == (1, Cout, H, W)
    assert jnp.allclose(out, ref, atol=1e-5, rtol=1e-5)

    print("KERNEL_OK")
</pallas_src>

<mosaic_0001>
module attributes {stable_mosaic.version = 11 : i64} {
  func.func @se_gate_kernel(%arg0: i32, %arg1: memref<1x96xf32, #tpu.memory_space<vmem>>, %arg2: memref<1152x96xf32, #tpu.memory_space<vmem>>, %arg3: memref<1x1152xf32, #tpu.memory_space<vmem>>, %arg4: memref<1152x49xf32, #tpu.memory_space<vmem>>, %arg5: memref<1152x49xf32, #tpu.memory_space<vmem>>) attributes {dimension_semantics = [#tpu.dimension_semantics<parallel>], iteration_bounds = array<i64: 2>, scalar_prefetch = 0 : i64, scratch_operands = 0 : i64, tpu.core_type = #tpu.core_type<tc>, window_params = [{pipeline_mode = #tpu.pipeline_mode<synchronous>, transform_indices = @transform_0, window_bounds = array<i64: 1, 96>}, {transform_indices = @transform_1, window_bounds = array<i64: 1152, 96>}, {transform_indices = @transform_2, window_bounds = array<i64: 1, 1152>}, {transform_indices = @transform_3, window_bounds = array<i64: 1152, 49>}, {transform_indices = @transform_4, window_bounds = array<i64: 1152, 49>}]} {
    %c0 = arith.constant 0 : index
    %c0_0 = arith.constant 0 : index
    %0 = vector.load %arg1[%c0, %c0_0] : memref<1x96xf32, #tpu.memory_space<vmem>>, vector<1x96xf32>
    %c0_1 = arith.constant 0 : index
    %c0_2 = arith.constant 0 : index
    %1 = vector.load %arg2[%c0_1, %c0_2] : memref<1152x96xf32, #tpu.memory_space<vmem>>, vector<1152x96xf32>
    %cst = arith.constant dense<0.000000e+00> : vector<1x1152xf32>
    %2 = tpu.matmul %0, %1, %cst {dimension_numbers = #tpu.dot_dimension_numbers<[1], [1], [0], [0], [0, 0, 1, 0], [], []>} : vector<1x96xf32>, vector<1152x96xf32>, vector<1x1152xf32> -> vector<1x1152xf32>
    %c0_3 = arith.constant 0 : index
    %c0_4 = arith.constant 0 : index
    %3 = vector.load %arg3[%c0_3, %c0_4] : memref<1x1152xf32, #tpu.memory_space<vmem>>, vector<1x1152xf32>
    %4 = arith.addf %2, %3 : vector<1x1152xf32>
    %5 = arith.negf %4 : vector<1x1152xf32>
    %6 = math.exp %5 : vector<1x1152xf32>
    %cst_5 = arith.constant 1.000000e+00 : f32
    %7 = vector.broadcast %cst_5 : f32 to vector<1x1152xf32>
    %8 = arith.addf %7, %6 : vector<1x1152xf32>
    %9 = arith.divf %7, %8 : vector<1x1152xf32>
    %10 = tpu.transpose %9, [1, 0] : vector<1x1152xf32> -> vector<1152x1xf32>
    %c0_6 = arith.constant 0 : index
    %c0_7 = arith.constant 0 : index
    %11 = vector.load %arg4[%c0_6, %c0_7] : memref<1152x49xf32, #tpu.memory_space<vmem>>, vector<1152x49xf32>
    %12 = vector.broadcast %10 : vector<1152x1xf32> to vector<1152x49xf32>
    %13 = arith.mulf %11, %12 : vector<1152x49xf32>
    %c0_8 = arith.constant 0 : index
    %c0_9 = arith.constant 0 : index
    %14 = vector.load %arg5[%c0_8, %c0_9] : memref<1152x49xf32, #tpu.memory_space<vmem>>, vector<1152x49xf32>
    tpu.vector_store %arg5[%c0_8, %c0_9], %13 {strides = array<i32>} : memref<1152x49xf32, #tpu.memory_space<vmem>>, vector<1152x49xf32>,
    return
  }
  func.func @transform_0(%arg0: i32) -> (i32, i32) {
    %c0_i32 = arith.constant 0 : i32
    %c0_i32_0 = arith.constant 0 : i32
    %c0_i32_1 = arith.constant 0 : i32
    return %c0_i32, %c0_i32_0 : i32, i32
  }
  func.func @transform_1(%arg0: i32) -> (i32, i32) {
    %c0_i32 = arith.constant 0 : i32
    %c0_i32_0 = arith.constant 0 : i32
    return %arg0, %c0_i32 : i32, i32
  }
  func.func @transform_2(%arg0: i32) -> (i32, i32) {
    %c0_i32 = arith.constant 0 : i32
    %c0_i32_0 = arith.constant 0 : i32
    return %c0_i32, %arg0 : i32, i32
  }
  func.func @transform_3(%arg0: i32) -> (i32, i32) {
    %c0_i32 = arith.constant 0 : i32
    %c0_i32_0 = arith.constant 0 : i32
    return %arg0, %c0_i32 : i32, i32
  }
  func.func @transform_4(%arg0: i32) -> (i32, i32) {
    %c0_i32 = arith.constant 0 : i32
    %c0_i32_0 = arith.constant 0 : i32
    return %arg0, %c0_i32 : i32, i32
  }
}

</mosaic_0001>

<llo_original>
// kernel: tpu_custom_call.1
$region0: #{tpu_custom_call.1}
  #allocation0 [shape = 'u32[]', space=smem, size = 0x4, offset = 0x4, fixed_abs, tag = 'smem constant byte address 0x4 - core index']
  #allocation1 [shape = 'u32[144,128]{1,0:T(1,128)}', space=vmem, size = 0x12000, scoped, tag = 'internal scratch']
  %s0 = inlined_call_operand.vmem [shape: f32[1,96], index: 0, kind: input, shape index: {}]
  %s1 = inlined_call_operand.vmem [shape: f32[2304,96], index: 1, kind: input, shape index: {}]
  %s2 = inlined_call_operand.vmem [shape: f32[1,2304], index: 2, kind: input, shape index: {}]
  %s3 = inlined_call_operand.vmem [shape: f32[2304,49], index: 3, kind: input, shape index: {}]
  %s4 = inlined_call_operand.vmem [shape: f32[2304,49], index: 4, kind: output, shape index: {}]
  %s5 = sld [smem:[#allocation0]]
  $region49: #{tpu_custom_call.1} parent=0
    _
  %s7 = ssub.s32 1, %s5
  %s8 = scalar_select 0, %s7, %s5
  loop: start=0, step=1, limit=4
  $region2: #{tpu_custom_call.1} parent=0 // loop_pre_header
    _
  $region3: #{tpu_custom_call.1} parent=0 // loop_header
    %s10 = sphi 0, %s14
    %p11 = scmp.ge.s32.totalorder %s10, 4
    %s18 = sphi 0, %s18
    %s20 = sphi 0, %s18
    %s21 = sphi 0, %s20
    %s35 = sphi 0, %s21
    %s41 = sphi 0, %s43
    %s44 = sphi 0, %s41
    %s45 = sphi 0, %s44
    %s61 = sphi 0, %s45
    %s67 = sphi 0, %s69
    %s70 = sphi 0, %s67
    %s71 = sphi 0, %s70
    %s87 = sphi 0, %s71
    %s93 = sphi 0, %s95
    %s96 = sphi 0, %s93
    %s97 = sphi 0, %s96
    %s113 = sphi 0, %s97
    %s119 = sphi 0, %s121
    %s122 = sphi 0, %s119
    %s123 = sphi 0, %s122
    %s139 = sphi 0, %s123
  $region4: #{tpu_custom_call.1} parent=0 // loop_header_branch
    %13 = sbr.rel (%p11) target = $region8
  $region5: #{tpu_custom_call.1} parent=0 // loop_body
    %s15 = ssub.s32 %s10, 1
    %s16 = ssub.s32 %s10, 2
    %s17 = sadd.s32 %s10, 1
    %s19 = sadd.s32 %s18, 1
    %p22 = scmp.eq.s32.totalorder %s10, 1
    %p23 = scmp.ne.s32.totalorder %s18, %s20
    %p24 = scmp.eq.s32.totalorder %s10, 0
    %p25 = por %p23, %p24
    %p26 = scmp.ne.s32.totalorder %s18, %s20
    %p27 = scmp.eq.s32.totalorder %s15, 1
    %p28 = por %p26, %p27
    %p29 = scmp.ne.s32.totalorder %s20, %s21
    %p30 = scmp.eq.s32.totalorder %s15, 0
    %p31 = por %p29, %p30
    %p32 = scmp.ne.s32.totalorder %s20, %s21
    %p33 = scmp.eq.s32.totalorder %s16, 1
    %p34 = por %p32, %p33
    %p36 = scmp.ne.s32.totalorder %s21, %s35
    %p37 = scmp.eq.s32.totalorder %s16, 0
    %p38 = por %p36, %p37
    %s39 = ssub.s32 %s10, %s17
    %p40 = scmp.eq.s32.totalorder %s39, 0
    %s42 = sadd.s32 %s41, 1
    %s43 = scalar_select %p40, %s41, %s42
    %p46 = pneg %p40
    %p47 = scmp.eq.s32.totalorder %s10, 1
    %p48 = por %p46, %p47
    %p49 = scmp.ne.s32.totalorder %s41, %s44
    %p50 = scmp.eq.s32.totalorder %s10, 0
    %p51 = por %p49, %p50
    %p52 = scmp.ne.s32.totalorder %s41, %s44
    %p53 = scmp.eq.s32.totalorder %s15, 1
    %p54 = por %p52, %p53
    %p55 = scmp.ne.s32.totalorder %s44, %s45
    %p56 = scmp.eq.s32.totalorder %s15, 0
    %p57 = por %p55, %p56
    %p58 = scmp.ne.s32.totalorder %s44, %s45
    %p59 = scmp.eq.s32.totalorder %s16, 1
    %p60 = por %p58, %p59
    %p62 = scmp.ne.s32.totalorder %s45, %s61
    %p63 = scmp.eq.s32.totalorder %s16, 0
    %p64 = por %p62, %p63
    %s65 = ssub.s32 %s10, %s17
    %p66 = scmp.eq.s32.totalorder %s65, 0
    %s68 = sadd.s32 %s67, 1
    %s69 = scalar_select %p66, %s67, %s68
    %p72 = pneg %p66
    %p73 = scmp.eq.s32.totalorder %s10, 1
    %p74 = por %p72, %p73
    %p75 = scmp.ne.s32.totalorder %s67, %s70
    %p76 = scmp.eq.s32.totalorder %s10, 0
    %p77 = por %p75, %p76
    %p78 = scmp.ne.s32.totalorder %s67, %s70
    %p79 = scmp.eq.s32.totalorder %s15, 1
    %p80 = por %p78, %p79
    %p81 = scmp.ne.s32.totalorder %s70, %s71
    %p82 = scmp.eq.s32.totalorder %s15, 0
    %p83 = por %p81, %p82
    %p84 = scmp.ne.s32.totalorder %s70, %s71
    %p85 = scmp.eq.s32.totalorder %s16, 1
    %p86 = por %p84, %p85
    %p88 = scmp.ne.s32.totalorder %s71, %s87
    %p89 = scmp.eq.s32.totalorder %s16, 0
    %p90 = por %p88, %p89
    %s91 = ssub.s32 %s10, %s17
    %p92 = scmp.eq.s32.totalorder %s91, 0
    %s94 = sadd.s32 %s93, 1
    %s95 = scalar_select %p92, %s93, %s94
    %p98 = pneg %p92
    %p99 = scmp.eq.s32.totalorder %s10, 1
    %p100 = por %p98, %p99
    %p101 = scmp.ne.s32.totalorder %s93, %s96
    %p102 = scmp.eq.s32.totalorder %s10, 0
    %p103 = por %p101, %p102
    %p104 = scmp.ne.s32.totalorder %s93, %s96
    %p105 = scmp.eq.s32.totalorder %s15, 1
    %p106 = por %p104, %p105
    %p107 = scmp.ne.s32.totalorder %s96, %s97
    %p108 = scmp.eq.s32.totalorder %s15, 0
    %p109 = por %p107, %p108
    %p110 = scmp.ne.s32.totalorder %s96, %s97
    %p111 = scmp.eq.s32.totalorder %s16, 1
    %p112 = por %p110, %p111
    %p114 = scmp.ne.s32.totalorder %s97, %s113
    %p115 = scmp.eq.s32.totalorder %s16, 0
    %p116 = por %p114, %p115
    %s117 = ssub.s32 %s10, %s17
    %p118 = scmp.eq.s32.totalorder %s117, 0
    %s120 = sadd.s32 %s119, 1
    %s121 = scalar_select %p118, %s119, %s120
    %p124 = pneg %p118
    %p125 = scmp.eq.s32.totalorder %s10, 1
    %p126 = por %p124, %p125
    %p127 = scmp.ne.s32.totalorder %s119, %s122
    %p128 = scmp.eq.s32.totalorder %s10, 0
    %p129 = por %p127, %p128
    %p130 = scmp.ne.s32.totalorder %s119, %s122
    %p131 = scmp.eq.s32.totalorder %s15, 1
    %p132 = por %p130, %p131
    %p133 = scmp.ne.s32.totalorder %s122, %s123
    %p134 = scmp.eq.s32.totalorder %s15, 0
    %p135 = por %p133, %p134
    %p136 = scmp.ne.s32.totalorder %s122, %s123
    %p137 = scmp.eq.s32.totalorder %s16, 1
    %p138 = por %p136, %p137
    %p140 = scmp.ne.s32.totalorder %s123, %s139
    %p141 = scmp.eq.s32.totalorder %s16, 0
    %p142 = por %p140, %p141
    %p143 = scmp.le.s32.totalorder 1, %s10
    %p144 = scmp.lt.s32.totalorder %s10, 3
    %p145 = pnand %p143, %p144
    %p146 = pneg %p145
    // Predicated region
    $region9: #{tpu_custom_call.1} parent=5 // pred_check
      _
    $region10: #{tpu_custom_call.1} parent=5 // pred_check_branch
      %148 = sbr.rel (%p145) target = $region12
    $region11: #{tpu_custom_call.1} parent=5 // pred_region
      %s149 = ssub.s32 %s10, 1
      // Predicated region
      $region13: #{tpu_custom_call.1} parent=11 // pred_check
        %p150 = pneg %p31
      $region14: #{tpu_custom_call.1} parent=11 // pred_check_branch
        %152 = sbr.rel (%p150) target = $region16
      $region15: #{tpu_custom_call.1} parent=11 // pred_region
        _
      $region16: #{tpu_custom_call.1} parent=11 // pred_fallthru
        _
    $region12: #{tpu_custom_call.1} parent=5 // pred_fallthru
      _
    %p153 = scmp.lt.s32.totalorder %s10, 2
    // Predicated region
    $region17: #{tpu_custom_call.1} parent=5 // pred_check
      %p154 = pneg %p153
    $region18: #{tpu_custom_call.1} parent=5 // pred_check_branch
      %156 = sbr.rel (%p154) target = $region20
    $region19: #{tpu_custom_call.1} parent=5 // pred_region
      // Predicated region
      $region21: #{tpu_custom_call.1} parent=19 // pred_check
        %p157 = pneg %p51
      $region22: #{tpu_custom_call.1} parent=19 // pred_check_branch
        %159 = sbr.rel (%p157) target = $region24
      $region23: #{tpu_custom_call.1} parent=19 // pred_region
        %s160 = smul.u32 144, %s10
        %p161 = scmp.lt.s32.totalorder %s160, 287
        %s162 = scalar_select %p161, %s160, 287
        %s163 = smul.addr %s162, 8
        %s164 = scalar_lea.vmem %s1, %s163
        %s165 = smul.u32 144, %s10
      $region24: #{tpu_custom_call.1} parent=19 // pred_fallthru
        _
      // Predicated region
      $region25: #{tpu_custom_call.1} parent=19 // pred_check
        %p166 = pneg %p77
      $region26: #{tpu_custom_call.1} parent=19 // pred_check_branch
        %168 = sbr.rel (%p166) target = $region28
      $region27: #{tpu_custom_call.1} parent=19 // pred_region
        %s169 = smul.u32 9, %s10
        %p170 = scmp.lt.s32.totalorder %s169, 17
        %s171 = scalar_select %p170, %s169, 17
        %s172 = scalar_lea.vmem %s2, %s171
        %s173 = smul.u32 9, %s10
      $region28: #{tpu_custom_call.1} parent=19 // pred_fallthru
        _
      // Predicated region
      $region29: #{tpu_custom_call.1} parent=19 // pred_check
        %p174 = pneg %p103
      $region30: #{tpu_custom_call.1} parent=19 // pred_check_branch
        %176 = sbr.rel (%p174) target = $region32
      $region31: #{tpu_custom_call.1} parent=19 // pred_region
        %s177 = smul.u32 144, %s10
        %p178 = scmp.lt.s32.totalorder %s177, 287
        %s179 = scalar_select %p178, %s177, 287
        %s180 = smul.addr %s179, 8
        %s181 = scalar_lea.vmem %s3, %s180
        %s182 = smul.u32 144, %s10
      $region32: #{tpu_custom_call.1} parent=19 // pred_fallthru
        _
    $region20: #{tpu_custom_call.1} parent=5 // pred_fallthru
      _
    %p183 = scmp.le.s32.totalorder 1, %s10
    %p184 = scmp.lt.s32.totalorder %s10, 3
    %p185 = pnand %p183, %p184
    %p186 = pneg %p185
    // Predicated region
    $region33: #{tpu_custom_call.1} parent=5 // pred_check
      _
    $region34: #{tpu_custom_call.1} parent=5 // pred_check_branch
      %188 = sbr.rel (%p185) target = $region36
    $region35: #{tpu_custom_call.1} parent=5 // pred_region
      %s189 = ssub.s32 %s10, 1
      %p190 = pneg %p31
      %p191 = pneg %p28
      %s192 = smul.u32 144, %s15
      %p193 = scmp.lt.s32.totalorder %s192, 287
      %s194 = scalar_select %p193, %s192, 287
      %s195 = smul.addr %s194, 8
      %s196 = scalar_lea.vmem %s1, %s195
      %p197 = pneg %p57
      %p198 = pneg %p54
      %s199 = smul.u32 9, %s15
      %p200 = scmp.lt.s32.totalorder %s199, 17
      %s201 = scalar_select %p200, %s199, 17
      %s202 = scalar_lea.vmem %s2, %s201
      %p203 = pneg %p83
      %p204 = pneg %p80
      %s205 = smul.u32 144, %s15
      %p206 = scmp.lt.s32.totalorder %s205, 287
      %s207 = scalar_select %p206, %s205, 287
      %s208 = smul.addr %s207, 8
      %s209 = scalar_lea.vmem %s3, %s208
      %p210 = pneg %p109
      %p211 = pneg %p106
      %p212 = pneg %p135
      %p213 = pneg %p132
      %s214 = smul.u32 144, %s15
      %p215 = scmp.lt.s32.totalorder %s214, 287
      %s216 = scalar_select %p215, %s214, 287
      %s217 = smul.addr %s216, 8
      %s218 = scalar_lea.vmem %s4, %s217
      %s219 = smul.u32 144, %s15
      %p220 = scmp.lt.s32.totalorder %s219, 287
      %s221 = scalar_select %p220, %s219, 287
      %s222 = smul.addr %s221, 8
      %s223 = scalar_lea.vmem %s1, %s222
      %s224 = smul.u32 144, %s15
      %s225 = smul.u32 9, %s15
      %p226 = scmp.lt.s32.totalorder %s225, 17
      %s227 = scalar_select %p226, %s225, 17
      %s228 = scalar_lea.vmem %s2, %s227
      %s229 = smul.u32 9, %s15
      %s230 = smul.u32 144, %s15
      %p231 = scmp.lt.s32.totalorder %s230, 287
      %s232 = scalar_select %p231, %s230, 287
      %s233 = smul.addr %s232, 8
      %s234 = scalar_lea.vmem %s3, %s233
      %s235 = smul.u32 144, %s15
      %s236 = smul.u32 144, %s15
      %p237 = scmp.lt.s32.totalorder %s236, 287
      %s238 = scalar_select %p237, %s236, 287
      %s239 = smul.addr %s238, 8
      %s240 = scalar_lea.vmem %s4, %s239
      %s241 = smul.u32 144, %s15
      %v242 = vld [vmem:[%s0] sm:$0x1]
      %v243 = vld [vmem:[%s223] sm:$0xff]
      %v244 = vld [vmem:[%s223 + $0x8] sm:$0xff]
      %v245 = vld [vmem:[%s223 + $0x10] sm:$0xff]
      %v246 = vld [vmem:[%s223 + $0x18] sm:$0xff]
      %v247 = vld [vmem:[%s223 + $0x20] sm:$0xff]
      %v248 = vld [vmem:[%s223 + $0x28] sm:$0xff]
      %v249 = vld [vmem:[%s223 + $0x30] sm:$0xff]
      %v250 = vld [vmem:[%s223 + $0x38] sm:$0xff]
      %v251 = vld [vmem:[%s223 + $0x40] sm:$0xff]
      %v252 = vld [vmem:[%s223 + $0x48] sm:$0xff]
      %v253 = vld [vmem:[%s223 + $0x50] sm:$0xff]
      %v254 = vld [vmem:[%s223 + $0x58] sm:$0xff]
      %v255 = vld [vmem:[%s223 + $0x60] sm:$0xff]
      %v256 = vld [vmem:[%s223 + $0x68] sm:$0xff]
      %v257 = vld [vmem:[%s223 + $0x70] sm:$0xff]
      %v258 = vld [vmem:[%s223 + $0x78] sm:$0xff]
      %v259 = vld [vmem:[%s223 + $0x80] sm:$0xff]
      %v260 = vld [vmem:[%s223 + $0x88] sm:$0xff]
      %v261 = vld [vmem:[%s223 + $0x90] sm:$0xff]
      %v262 = vld [vmem:[%s223 + $0x98] sm:$0xff]
      %v263 = vld [vmem:[%s223 + $0xa0] sm:$0xff]
      %v264 = vld [vmem:[%s223 + $0xa8] sm:$0xff]
      %v265 = vld [vmem:[%s223 + $0xb0] sm:$0xff]
      %v266 = vld [vmem:[%s223 + $0xb8] sm:$0xff]
      %v267 = vld [vmem:[%s223 + $0xc0] sm:$0xff]
      %v268 = vld [vmem:[%s223 + $0xc8] sm:$0xff]
      %v269 = vld [vmem:[%s223 + $0xd0] sm:$0xff]
      %v270 = vld [vmem:[%s223 + $0xd8] sm:$0xff]
      %v271 = vld [vmem:[%s223 + $0xe0] sm:$0xff]
      %v272 = vld [vmem:[%s223 + $0xe8] sm:$0xff]
      %v273 = vld [vmem:[%s223 + $0xf0] sm:$0xff]
      %v274 = vld [vmem:[%s223 + $0xf8] sm:$0xff]
      %v275 = vld [vmem:[%s223 + $0x100] sm:$0xff]
      %v276 = vld [vmem:[%s223 + $0x108] sm:$0xff]
      %v277 = vld [vmem:[%s223 + $0x110] sm:$0xff]
      %v278 = vld [vmem:[%s223 + $0x118] sm:$0xff]
      %v279 = vld [vmem:[%s223 + $0x120] sm:$0xff]
      %v280 = vld [vmem:[%s223 + $0x128] sm:$0xff]
      %v281 = vld [vmem:[%s223 + $0x130] sm:$0xff]
      %v282 = vld [vmem:[%s223 + $0x138] sm:$0xff]
      %v283 = vld [vmem:[%s223 + $0x140] sm:$0xff]
      %v284 = vld [vmem:[%s223 + $0x148] sm:$0xff]
      %v285 = vld [vmem:[%s223 + $0x150] sm:$0xff]
      %v286 = vld [vmem:[%s223 + $0x158] sm:$0xff]
      %v287 = vld [vmem:[%s223 + $0x160] sm:$0xff]
      %v288 = vld [vmem:[%s223 + $0x168] sm:$0xff]
      %v289 = vld [vmem:[%s223 + $0x170] sm:$0xff]
      %v290 = vld [vmem:[%s223 + $0x178] sm:$0xff]
      %v291 = vld [vmem:[%s223 + $0x180] sm:$0xff]
      %v292 = vld [vmem:[%s223 + $0x188] sm:$0xff]
      %v293 = vld [vmem:[%s223 + $0x190] sm:$0xff]
      %v294 = vld [vmem:[%s223 + $0x198] sm:$0xff]
      %v295 = vld [vmem:[%s223 + $0x1a0] sm:$0xff]
      %v296 = vld [vmem:[%s223 + $0x1a8] sm:$0xff]
      %v297 = vld [vmem:[%s223 + $0x1b0] sm:$0xff]
      %v298 = vld [vmem:[%s223 + $0x1b8] sm:$0xff]
      %v299 = vld [vmem:[%s223 + $0x1c0] sm:$0xff]
      %v300 = vld [vmem:[%s223 + $0x1c8] sm:$0xff]
      %v301 = vld [vmem:[%s223 + $0x1d0] sm:$0xff]
      %v302 = vld [vmem:[%s223 + $0x1d8] sm:$0xff]
      %v303 = vld [vmem:[%s223 + $0x1e0] sm:$0xff]
      %v304 = vld [vmem:[%s223 + $0x1e8] sm:$0xff]
      %v305 = vld [vmem:[%s223 + $0x1f0] sm:$0xff]
      %v306 = vld [vmem:[%s223 + $0x1f8] sm:$0xff]
      %v307 = vld [vmem:[%s223 + $0x200] sm:$0xff]
      %v308 = vld [vmem:[%s223 + $0x208] sm:$0xff]
      %v309 = vld [vmem:[%s223 + $0x210] sm:$0xff]
      %v310 = vld [vmem:[%s223 + $0x218] sm:$0xff]
      %v311 = vld [vmem:[%s223 + $0x220] sm:$0xff]
      %v312 = vld [vmem:[%s223 + $0x228] sm:$0xff]
      %v313 = vld [vmem:[%s223 + $0x230] sm:$0xff]
      %v314 = vld [vmem:[%s223 + $0x238] sm:$0xff]
      %v315 = vld [vmem:[%s223 + $0x240] sm:$0xff]
      %v316 = vld [vmem:[%s223 + $0x248] sm:$0xff]
      %v317 = vld [vmem:[%s223 + $0x250] sm:$0xff]
      %v318 = vld [vmem:[%s223 + $0x258] sm:$0xff]
      %v319 = vld [vmem:[%s223 + $0x260] sm:$0xff]
      %v320 = vld [vmem:[%s223 + $0x268] sm:$0xff]
      %v321 = vld [vmem:[%s223 + $0x270] sm:$0xff]
      %v322 = vld [vmem:[%s223 + $0x278] sm:$0xff]
      %v323 = vld [vmem:[%s223 + $0x280] sm:$0xff]
      %v324 = vld [vmem:[%s223 + $0x288] sm:$0xff]
      %v325 = vld [vmem:[%s223 + $0x290] sm:$0xff]
      %v326 = vld [vmem:[%s223 + $0x298] sm:$0xff]
      %v327 = vld [vmem:[%s223 + $0x2a0] sm:$0xff]
      %v328 = vld [vmem:[%s223 + $0x2a8] sm:$0xff]
      %v329 = vld [vmem:[%s223 + $0x2b0] sm:$0xff]
      %v330 = vld [vmem:[%s223 + $0x2b8] sm:$0xff]
      %v331 = vld [vmem:[%s223 + $0x2c0] sm:$0xff]
      %v332 = vld [vmem:[%s223 + $0x2c8] sm:$0xff]
      %v333 = vld [vmem:[%s223 + $0x2d0] sm:$0xff]
      %v334 = vld [vmem:[%s223 + $0x2d8] sm:$0xff]
      %v335 = vld [vmem:[%s223 + $0x2e0] sm:$0xff]
      %v336 = vld [vmem:[%s223 + $0x2e8] sm:$0xff]
      %v337 = vld [vmem:[%s223 + $0x2f0] sm:$0xff]
      %v338 = vld [vmem:[%s223 + $0x2f8] sm:$0xff]
      %v339 = vld [vmem:[%s223 + $0x300] sm:$0xff]
      %v340 = vld [vmem:[%s223 + $0x308] sm:$0xff]
      %v341 = vld [vmem:[%s223 + $0x310] sm:$0xff]
      %v342 = vld [vmem:[%s223 + $0x318] sm:$0xff]
      %v343 = vld [vmem:[%s223 + $0x320] sm:$0xff]
      %v344 = vld [vmem:[%s223 + $0x328] sm:$0xff]
      %v345 = vld [vmem:[%s223 + $0x330] sm:$0xff]
      %v346 = vld [vmem:[%s223 + $0x338] sm:$0xff]
      %v347 = vld [vmem:[%s223 + $0x340] sm:$0xff]
      %v348 = vld [vmem:[%s223 + $0x348] sm:$0xff]
      %v349 = vld [vmem:[%s223 + $0x350] sm:$0xff]
      %v350 = vld [vmem:[%s223 + $0x358] sm:$0xff]
      %v351 = vld [vmem:[%s223 + $0x360] sm:$0xff]
      %v352 = vld [vmem:[%s223 + $0x368] sm:$0xff]
      %v353 = vld [vmem:[%s223 + $0x370] sm:$0xff]
      %v354 = vld [vmem:[%s223 + $0x378] sm:$0xff]
      %v355 = vld [vmem:[%s223 + $0x380] sm:$0xff]
      %v356 = vld [vmem:[%s223 + $0x388] sm:$0xff]
      %v357 = vld [vmem:[%s223 + $0x390] sm:$0xff]
      %v358 = vld [vmem:[%s223 + $0x398] sm:$0xff]
      %v359 = vld [vmem:[%s223 + $0x3a0] sm:$0xff]
      %v360 = vld [vmem:[%s223 + $0x3a8] sm:$0xff]
      %v361 = vld [vmem:[%s223 + $0x3b0] sm:$0xff]
      %v362 = vld [vmem:[%s223 + $0x3b8] sm:$0xff]
      %v363 = vld [vmem:[%s223 + $0x3c0] sm:$0xff]
      %v364 = vld [vmem:[%s223 + $0x3c8] sm:$0xff]
      %v365 = vld [vmem:[%s223 + $0x3d0] sm:$0xff]
      %v366 = vld [vmem:[%s223 + $0x3d8] sm:$0xff]
      %v367 = vld [vmem:[%s223 + $0x3e0] sm:$0xff]
      %v368 = vld [vmem:[%s223 + $0x3e8] sm:$0xff]
      %v369 = vld [vmem:[%s223 + $0x3f0] sm:$0xff]
      %v370 = vld [vmem:[%s223 + $0x3f8] sm:$0xff]
      %v371 = vld [vmem:[%s223 + $0x400] sm:$0xff]
      %v372 = vld [vmem:[%s223 + $0x408] sm:$0xff]
      %v373 = vld [vmem:[%s223 + $0x410] sm:$0xff]
      %v374 = vld [vmem:[%s223 + $0x418] sm:$0xff]
      %v375 = vld [vmem:[%s223 + $0x420] sm:$0xff]
      %v376 = vld [vmem:[%s223 + $0x428] sm:$0xff]
      %v377 = vld [vmem:[%s223 + $0x430] sm:$0xff]
      %v378 = vld [vmem:[%s223 + $0x438] sm:$0xff]
      %v379 = vld [vmem:[%s223 + $0x440] sm:$0xff]
      %v380 = vld [vmem:[%s223 + $0x448] sm:$0xff]
      %v381 = vld [vmem:[%s223 + $0x450] sm:$0xff]
      %v382 = vld [vmem:[%s223 + $0x458] sm:$0xff]
      %v383 = vld [vmem:[%s223 + $0x460] sm:$0xff]
      %v384 = vld [vmem:[%s223 + $0x468] sm:$0xff]
      %v385 = vld [vmem:[%s223 + $0x470] sm:$0xff]
      %v386 = vld [vmem:[%s223 + $0x478] sm:$0xff]
      %v387 = vld [vmem:[%s228] sm:$0xff]
      %v388 = vld [vmem:[%s228 + $0x8] sm:$0x1]
      %v391 = vlaneseq
      %v392 = vshrl.u32 %v391, 7
      %v393 = vsub.s32 0, %v392
      %v394 = vrot.slane %v387, %v393
      %v395 = vlaneseq
      %v396 = vshrl.u32 %v395, 7
      %v397 = vsub.s32 1, %v396
      %v398 = vrot.slane %v387, %v397
      %v399 = vlaneseq
      %v400 = vshrl.u32 %v399, 7
      %v401 = vsub.s32 2, %v400
      %v402 = vrot.slane %v387, %v401
      %v403 = vlaneseq
      %v404 = vshrl.u32 %v403, 7
      %v405 = vsub.s32 3, %v404
      %v406 = vrot.slane %v387, %v405
      %v407 = vlaneseq
      %v408 = vshrl.u32 %v407, 7
      %v409 = vsub.s32 4, %v408
      %v410 = vrot.slane %v387, %v409
      %v411 = vlaneseq
      %v412 = vshrl.u32 %v411, 7
      %v413 = vsub.s32 5, %v412
      %v414 = vrot.slane %v387, %v413
      %v415 = vlaneseq
      %v416 = vshrl.u32 %v415, 7
      %v417 = vsub.s32 6, %v416
      %v418 = vrot.slane %v387, %v417
      %v419 = vlaneseq
      %v420 = vshrl.u32 %v419, 7
      %v421 = vsub.s32 7, %v420
      %v422 = vrot.slane %v387, %v421
      %v423 = vlaneseq
      %v424 = vshrl.u32 %v423, 7
      %v425 = vsub.s32 0, %v424
      %v426 = vrot.slane %v388, %v425
      %vm436 = vcmask 785408
      %v438 = vsel %vm436, %v242, 0
      %v441 = vsel %vm436, %v243, 0
      %v444 = vsel %vm436, %v244, 0
      %v447 = vsel %vm436, %v245, 0
      %v450 = vsel %vm436, %v246, 0
      %v453 = vsel %vm436, %v247, 0
      %v456 = vsel %vm436, %v248, 0
      %v459 = vsel %vm436, %v249, 0
      %v462 = vsel %vm436, %v250, 0
      %v465 = vsel %vm436, %v251, 0
      %v468 = vsel %vm436, %v252, 0
      %v471 = vsel %vm436, %v253, 0
      %v474 = vsel %vm436, %v254, 0
      %v477 = vsel %vm436, %v255, 0
      %v480 = vsel %vm436, %v256, 0
      %v483 = vsel %vm436, %v257, 0
      %v486 = vsel %vm436, %v258, 0
      %v489 = vsel %vm436, %v259, 0
      %v492 = vsel %vm436, %v260, 0
      %v495 = vsel %vm436, %v261, 0
      %v498 = vsel %vm436, %v262, 0
      %v501 = vsel %vm436, %v263, 0
      %v504 = vsel %vm436, %v264, 0
      %v507 = vsel %vm436, %v265, 0
      %v510 = vsel %vm436, %v266, 0
      %v513 = vsel %vm436, %v267, 0
      %v516 = vsel %vm436, %v268, 0
      %v519 = vsel %vm436, %v269, 0
      %v522 = vsel %vm436, %v270, 0
      %v525 = vsel %vm436, %v271, 0
      %v528 = vsel %vm436, %v272, 0
      %v531 = vsel %vm436, %v273, 0
      %v534 = vsel %vm436, %v274, 0
      %v537 = vsel %vm436, %v275, 0
      %v540 = vsel %vm436, %v276, 0
      %v543 = vsel %vm436, %v277, 0
      %v546 = vsel %vm436, %v278, 0
      %v549 = vsel %vm436, %v279, 0
      %v552 = vsel %vm436, %v280, 0
      %v555 = vsel %vm436, %v281, 0
      %v558 = vsel %vm436, %v282, 0
      %v561 = vsel %vm436, %v283, 0
      %v564 = vsel %vm436, %v284, 0
      %v567 = vsel %vm436, %v285, 0
      %v570 = vsel %vm436, %v286, 0
      %v573 = vsel %vm436, %v287, 0
      %v576 = vsel %vm436, %v288, 0
      %v579 = vsel %vm436, %v289, 0
      %v582 = vsel %vm436, %v290, 0
      %v585 = vsel %vm436, %v291, 0
      %v588 = vsel %vm436, %v292, 0
      %v591 = vsel %vm436, %v293, 0
      %v594 = vsel %vm436, %v294, 0
      %v597 = vsel %vm436, %v295, 0
      %v600 = vsel %vm436, %v296, 0
      %v603 = vsel %vm436, %v297, 0
      %v606 = vsel %vm436, %v298, 0
      %v609 = vsel %vm436, %v299, 0
      %v612 = vsel %vm436, %v300, 0
      %v615 = vsel %vm436, %v301, 0
      %v618 = vsel %vm436, %v302, 0
      %v621 = vsel %vm436, %v303, 0
      %v624 = vsel %vm436, %v304, 0
      %v627 = vsel %vm436, %v305, 0
      %v630 = vsel %vm436, %v306, 0
      %v633 = vsel %vm436, %v307, 0
      %v636 = vsel %vm436, %v308, 0
      %v639 = vsel %vm436, %v309, 0
      %v642 = vsel %vm436, %v310, 0
      %v645 = vsel %vm436, %v311, 0
      %v648 = vsel %vm436, %v312, 0
      %v651 = vsel %vm436, %v313, 0
      %v654 = vsel %vm436, %v314, 0
      %v657 = vsel %vm436, %v315, 0
      %v660 = vsel %vm436, %v316, 0
      %v663 = vsel %vm436, %v317, 0
      %v666 = vsel %vm436, %v318, 0
      %v669 = vsel %vm436, %v319, 0
      %v672 = vsel %vm436, %v320, 0
      %v675 = vsel %vm436, %v321, 0
      %v678 = vsel %vm436, %v322, 0
      %v681 = vsel %vm436, %v323, 0
      %v684 = vsel %vm436, %v324, 0
      %v687 = vsel %vm436, %v325, 0
      %v690 = vsel %vm436, %v326, 0
      %v693 = vsel %vm436, %v327, 0
      %v696 = vsel %vm436, %v328, 0
      %v699 = vsel %vm436, %v329, 0
      %v702 = vsel %vm436, %v330, 0
      %v705 = vsel %vm436, %v331, 0
      %v708 = vsel %vm436, %v332, 0
      %v711 = vsel %vm436, %v333, 0
      %v714 = vsel %vm436, %v334, 0
      %v717 = vsel %vm436, %v335, 0
      %v720 = vsel %vm436, %v336, 0
      %v723 = vsel %vm436, %v337, 0
      %v726 = vsel %vm436, %v338, 0
      %v729 = vsel %vm436, %v339, 0
      %v732 = vsel %vm436, %v340, 0
      %v735 = vsel %vm436, %v341, 0
      %v738 = vsel %vm436, %v342, 0
      %v741 = vsel %vm436, %v343, 0
      %v744 = vsel %vm436, %v344, 0
      %v747 = vsel %vm436, %v345, 0
      %v750 = vsel %vm436, %v346, 0
      %v753 = vsel %vm436, %v347, 0
      %v756 = vsel %vm436, %v348, 0
      %v759 = vsel %vm436, %v349, 0
      %v762 = vsel %vm436, %v350, 0
      %v765 = vsel %vm436, %v351, 0
      %v768 = vsel %vm436, %v352, 0
      %v771 = vsel %vm436, %v353, 0
      %v774 = vsel %vm436, %v354, 0
      %v777 = vsel %vm436, %v355, 0
      %v780 = vsel %vm436, %v356, 0
      %v783 = vsel %vm436, %v357, 0
      %v786 = vsel %vm436, %v358, 0
      %v789 = vsel %vm436, %v359, 0
      %v792 = vsel %vm436, %v360, 0
      %v795 = vsel %vm436, %v361, 0
      %v798 = vsel %vm436, %v362, 0
      %v801 = vsel %vm436, %v363, 0
      %v804 = vsel %vm436, %v364, 0
      %v807 = vsel %vm436, %v365, 0
      %v810 = vsel %vm436, %v366, 0
      %v813 = vsel %vm436, %v367, 0
      %v816 = vsel %vm436, %v368, 0
      %v819 = vsel %vm436, %v369, 0
      %v822 = vsel %vm436, %v370, 0
      %v825 = vsel %vm436, %v371, 0
      %v828 = vsel %vm436, %v372, 0
      %v831 = vsel %vm436, %v373, 0
      %v834 = vsel %vm436, %v374, 0
      %v837 = vsel %vm436, %v375, 0
      %v840 = vsel %vm436, %v376, 0
      %v843 = vsel %vm436, %v377, 0
      %v846 = vsel %vm436, %v378, 0
      %v849 = vsel %vm436, %v379, 0
      %v852 = vsel %vm436, %v380, 0
      %v855 = vsel %vm436, %v381, 0
      %v858 = vsel %vm436, %v382, 0
      %v861 = vsel %vm436, %v383, 0
      %v864 = vsel %vm436, %v384, 0
      %v867 = vsel %vm436, %v385, 0
      %v870 = vsel %vm436, %v386, 0
      %872 = vmatprep.subr.mxu0 0.0
      %873 = vmatpush1.xpose.msra.mxu0 %v441
      %874 = vmatprep.subr.mxu0 0.0
      %875 = vmatpush1.xpose.msra.mxu0 %v444
      %876 = vmatprep.subr.mxu0 0.0
      %877 = vmatpush1.xpose.msra.mxu0 %v447
      %878 = vmatprep.subr.mxu0 0.0
      %879 = vmatpush1.xpose.msra.mxu0 %v450
      %880 = vmatprep.subr.mxu0 0.0
      %881 = vmatpush1.xpose.msra.mxu0 %v453
      %882 = vmatprep.subr.mxu0 0.0
      %883 = vmatpush1.xpose.msra.mxu0 %v456
      %884 = vmatprep.subr.mxu0 0.0
      %885 = vmatpush1.xpose.msra.mxu0 %v459
      %886 = vmatprep.subr.mxu0 0.0
      %887 = vmatpush1.xpose.msra.mxu0 %v462
      %888 = vmatprep.subr.mxu0 0.0
      %889 = vmatpush1.xpose.msra.mxu0 %v465
      %890 = vmatprep.subr.mxu0 0.0
      %891 = vmatpush1.xpose.msra.mxu0 %v468
      %892 = vmatprep.subr.mxu0 0.0
      %893 = vmatpush1.xpose.msra.mxu0 %v471
      %894 = vmatprep.subr.mxu0 0.0
      %895 = vmatpush1.xpose.msra.mxu0 %v474
      %896 = vmatprep.subr.mxu0 0.0
      %897 = vmatpush1.xpose.msra.mxu0 %v477
      %898 = vmatprep.subr.mxu0 0.0
      %899 = vmatpush1.xpose.msra.mxu0 %v480
      %900 = vmatprep.subr.mxu0 0.0
      %901 = vmatpush1.xpose.msra.mxu0 %v483
      %902 = vmatprep.subr.mxu0 0.0
      %903 = vmatpush1.xpose.msra.mxu0 %v486
      %904 = vmatprep.subr.mxu0 0.0
      %905 = vmatpush1.xpose.msra.mxu0 %v489
      %906 = vmatprep.subr.mxu0 0.0
      %907 = vmatpush1.xpose.msra.mxu0 %v492
      %908 = vmatprep.subr.mxu0 0.0
      %909 = vmatpush1.xpose.msra.mxu0 %v495
      %910 = vmatprep.subr.mxu0 0.0
      %911 = vmatpush1.xpose.msra.mxu0 %v498
      %912 = vmatprep.subr.mxu0 0.0
      %913 = vmatpush1.xpose.msra.mxu0 %v501
      %914 = vmatprep.subr.mxu0 0.0
      %915 = vmatpush1.xpose.msra.mxu0 %v504
      %916 = vmatprep.subr.mxu0 0.0
      %917 = vmatpush1.xpose.msra.mxu0 %v507
      %918 = vmatprep.subr.mxu0 0.0
      %919 = vmatpush1.xpose.msra.mxu0 %v510
      %920 = vmatprep.subr.mxu0 0.0
      %921 = vmatpush1.xpose.msra.mxu0 %v513
      %922 = vmatprep.subr.mxu0 0.0
      %923 = vmatpush1.xpose.msra.mxu0 %v516
      %924 = vmatprep.subr.mxu0 0.0
      %925 = vmatpush1.xpose.msra.mxu0 %v519
      %926 = vmatprep.subr.mxu0 0.0
      %927 = vmatpush1.xpose.msra.mxu0 %v522
      %928 = vmatprep.subr.mxu0 0.0
      %929 = vmatpush1.xpose.msra.mxu0 %v525
      %930 = vmatprep.subr.mxu0 0.0
      %931 = vmatpush1.xpose.msra.mxu0 %v528
      %932 = vmatprep.subr.mxu0 0.0
      %933 = vmatpush1.xpose.msra.mxu0 %v531
      %934 = vmatprep.subr.mxu0 0.0
      %935 = vmatpush1.xpose.msra.mxu0 %v534
      %936 = vmatprep.mubr.f32.mxu0 0.0
      %937 = vmatmul.mubr.f32.gmra.mrb[0].mxu0 %v438
      %v938 = vpop.f32.mrb[0].mxu0
      %v939 = vadd.f32 %v394, %v938
      %v940 = vpop.f32.mrb[0].mxu0
      %v941 = vadd.f32 %v398, %v940
      %942 = vdwg.mxu0
      %943 = vmatprep.subr.mxu0 0.0
      %944 = vmatpush1.xpose.msra.mxu0 %v537
      %945 = vmatprep.subr.mxu0 0.0
      %946 = vmatpush1.xpose.msra.mxu0 %v540
      %947 = vmatprep.subr.mxu0 0.0
      %948 = vmatpush1.xpose.msra.mxu0 %v543
      %949 = vmatprep.subr.mxu0 0.0
      %950 = vmatpush1.xpose.msra.mxu0 %v546
      %951 = vmatprep.subr.mxu0 0.0
      %952 = vmatpush1.xpose.msra.mxu0 %v549
      %953 = vmatprep.subr.mxu0 0.0
      %954 = vmatpush1.xpose.msra.mxu0 %v552
      %955 = vmatprep.subr.mxu0 0.0
      %956 = vmatpush1.xpose.msra.mxu0 %v555
      %957 = vmatprep.subr.mxu0 0.0
      %958 = vmatpush1.xpose.msra.mxu0 %v558
      %959 = vmatprep.subr.mxu0 0.0
      %960 = vmatpush1.xpose.msra.mxu0 %v561
      %961 = vmatprep.subr.mxu0 0.0
      %962 = vmatpush1.xpose.msra.mxu0 %v564
      %963 = vmatprep.subr.mxu0 0.0
      %964 = vmatpush1.xpose.msra.mxu0 %v567
      %965 = vmatprep.subr.mxu0 0.0
      %966 = vmatpush1.xpose.msra.mxu0 %v570
      %967 = vmatprep.subr.mxu0 0.0
      %968 = vmatpush1.xpose.msra.mxu0 %v573
      %969 = vmatprep.subr.mxu0 0.0
      %970 = vmatpush1.xpose.msra.mxu0 %v576
      %971 = vmatprep.subr.mxu0 0.0
      %972 = vmatpush1.xpose.msra.mxu0 %v579
      %973 = vmatprep.subr.mxu0 0.0
      %974 = vmatpush1.xpose.msra.mxu0 %v582
      %975 = vmatprep.subr.mxu0 0.0
      %976 = vmatpush1.xpose.msra.mxu0 %v585
      %977 = vmatprep.subr.mxu0 0.0
      %978 = vmatpush1.xpose.msra.mxu0 %v588
      %979 = vmatprep.subr.mxu0 0.0
      %980 = vmatpush1.xpose.msra.mxu0 %v591
      %981 = vmatprep.subr.mxu0 0.0
      %982 = vmatpush1.xpose.msra.mxu0 %v594
      %983 = vmatprep.subr.mxu0 0.0
      %984 = vmatpush1.xpose.msra.mxu0 %v597
      %985 = vmatprep.subr.mxu0 0.0
      %986 = vmatpush1.xpose.msra.mxu0 %v600
      %987 = vmatprep.subr.mxu0 0.0
      %988 = vmatpush1.xpose.msra.mxu0 %v603
      %989 = vmatprep.subr.mxu0 0.0
      %990 = vmatpush1.xpose.msra.mxu0 %v606
      %991 = vmatprep.subr.mxu0 0.0
      %992 = vmatpush1.xpose.msra.mxu0 %v609
      %993 = vmatprep.subr.mxu0 0.0
      %994 = vmatpush1.xpose.msra.mxu0 %v612
      %995 = vmatprep.subr.mxu0 0.0
      %996 = vmatpush1.xpose.msra.mxu0 %v615
      %997 = vmatprep.subr.mxu0 0.0
      %998 = vmatpush1.xpose.msra.mxu0 %v618
      %999 = vmatprep.subr.mxu0 0.0
      %1000 = vmatpush1.xpose.msra.mxu0 %v621
      %1001 = vmatprep.subr.mxu0 0.0
      %1002 = vmatpush1.xpose.msra.mxu0 %v624
      %1003 = vmatprep.subr.mxu0 0.0
      %1004 = vmatpush1.xpose.msra.mxu0 %v627
      %1005 = vmatprep.subr.mxu0 0.0
      %1006 = vmatpush1.xpose.msra.mxu0 %v630
      %1007 = vmatprep.mubr.f32.mxu0 0.0
      %1008 = vmatmul.mubr.f32.gmra.mrb[0].mxu0 %v438
      %v1009 = vpop.f32.mrb[0].mxu0
      %v1010 = vadd.f32 %v402, %v1009
      %v1011 = vpop.f32.mrb[0].mxu0
      %v1012 = vadd.f32 %v406, %v1011
      %1013 = vdwg.mxu0
      %1014 = vmatprep.subr.mxu0 0.0
      %1015 = vmatpush1.xpose.msra.mxu0 %v633
      %1016 = vmatprep.subr.mxu0 0.0
      %1017 = vmatpush1.xpose.msra.mxu0 %v636
      %1018 = vmatprep.subr.mxu0 0.0
      %1019 = vmatpush1.xpose.msra.mxu0 %v639
      %1020 = vmatprep.subr.mxu0 0.0
      %1021 = vmatpush1.xpose.msra.mxu0 %v642
      %1022 = vmatprep.subr.mxu0 0.0
      %1023 = vmatpush1.xpose.msra.mxu0 %v645
      %1024 = vmatprep.subr.mxu0 0.0
      %1025 = vmatpush1.xpose.msra.mxu0 %v648
      %1026 = vmatprep.subr.mxu0 0.0
      %1027 = vmatpush1.xpose.msra.mxu0 %v651
      %1028 = vmatprep.subr.mxu0 0.0
      %1029 = vmatpush1.xpose.msra.mxu0 %v654
      %1030 = vmatprep.subr.mxu0 0.0
      %1031 = vmatpush1.xpose.msra.mxu0 %v657
      %1032 = vmatprep.subr.mxu0 0.0
      %1033 = vmatpush1.xpose.msra.mxu0 %v660
      %1034 = vmatprep.subr.mxu0 0.0
      %1035 = vmatpush1.xpose.msra.mxu0 %v663
      %1036 = vmatprep.subr.mxu0 0.0
      %1037 = vmatpush1.xpose.msra.mxu0 %v666
      %1038 = vmatprep.subr.mxu0 0.0
      %1039 = vmatpush1.xpose.msra.mxu0 %v669
      %1040 = vmatprep.subr.mxu0 0.0
      %1041 = vmatpush1.xpose.msra.mxu0 %v672
      %1042 = vmatprep.subr.mxu0 0.0
      %1043 = vmatpush1.xpose.msra.mxu0 %v675
      %1044 = vmatprep.subr.mxu0 0.0
      %1045 = vmatpush1.xpose.msra.mxu0 %v678
      %1046 = vmatprep.subr.mxu0 0.0
      %1047 = vmatpush1.xpose.msra.mxu0 %v681
      %1048 = vmatprep.subr.mxu0 0.0
      %1049 = vmatpush1.xpose.msra.mxu0 %v684
      %1050 = vmatprep.subr.mxu0 0.0
      %1051 = vmatpush1.xpose.msra.mxu0 %v687
      %1052 = vmatprep.subr.mxu0 0.0
      %1053 = vmatpush1.xpose.msra.mxu0 %v690
      %1054 = vmatprep.subr.mxu0 0.0
      %1055 = vmatpush1.xpose.msra.mxu0 %v693
      %1056 = vmatprep.subr.mxu0 0.0
      %1057 = vmatpush1.xpose.msra.mxu0 %v696
      %1058 = vmatprep.subr.mxu0 0.0
      %1059 = vmatpush1.xpose.msra.mxu0 %v699
      %1060 = vmatprep.subr.mxu0 0.0
      %1061 = vmatpush1.xpose.msra.mxu0 %v702
      %1062 = vmatprep.subr.mxu0 0.0
      %1063 = vmatpush1.xpose.msra.mxu0 %v705
      %1064 = vmatprep.subr.mxu0 0.0
      %1065 = vmatpush1.xpose.msra.mxu0 %v708
      %1066 = vmatprep.subr.mxu0 0.0
      %1067 = vmatpush1.xpose.msra.mxu0 %v711
      %1068 = vmatprep.subr.mxu0 0.0
      %1069 = vmatpush1.xpose.msra.mxu0 %v714
      %1070 = vmatprep.subr.mxu0 0.0
      %1071 = vmatpush1.xpose.msra.mxu0 %v717
      %1072 = vmatprep.subr.mxu0 0.0
      %1073 = vmatpush1.xpose.msra.mxu0 %v720
      %1074 = vmatprep.subr.mxu0 0.0
      %1075 = vmatpush1.xpose.msra.mxu0 %v723
      %1076 = vmatprep.subr.mxu0 0.0
      %1077 = vmatpush1.xpose.msra.mxu0 %v726
      %1078 = vmatprep.mubr.f32.mxu0 0.0
      %1079 = vmatmul.mubr.f32.gmra.mrb[0].mxu0 %v438
      %v1080 = vpop.f32.mrb[0].mxu0
      %v1081 = vadd.f32 %v410, %v1080
      %v1082 = vpop.f32.mrb[0].mxu0
      %v1083 = vadd.f32 %v414, %v1082
      %1084 = vdwg.mxu0
      %1085 = vmatprep.subr.mxu0 0.0
      %1086 = vmatpush1.xpose.msra.mxu0 %v729
      %1087 = vmatprep.subr.mxu0 0.0
      %1088 = vmatpush1.xpose.msra.mxu0 %v732
      %1089 = vmatprep.subr.mxu0 0.0
      %1090 = vmatpush1.xpose.msra.mxu0 %v735
      %1091 = vmatprep.subr.mxu0 0.0
      %1092 = vmatpush1.xpose.msra.mxu0 %v738
      %1093 = vmatprep.subr.mxu0 0.0
      %1094 = vmatpush1.xpose.msra.mxu0 %v741
      %1095 = vmatprep.subr.mxu0 0.0
      %1096 = vmatpush1.xpose.msra.mxu0 %v744
      %1097 = vmatprep.subr.mxu0 0.0
      %1098 = vmatpush1.xpose.msra.mxu0 %v747
      %1099 = vmatprep.subr.mxu0 0.0
      %1100 = vmatpush1.xpose.msra.mxu0 %v750
      %1101 = vmatprep.subr.mxu0 0.0
      %1102 = vmatpush1.xpose.msra.mxu0 %v753
      %1103 = vmatprep.subr.mxu0 0.0
      %1104 = vmatpush1.xpose.msra.mxu0 %v756
      %1105 = vmatprep.subr.mxu0 0.0
      %1106 = vmatpush1.xpose.msra.mxu0 %v759
      %1107 = vmatprep.subr.mxu0 0.0
      %1108 = vmatpush1.xpose.msra.mxu0 %v762
      %1109 = vmatprep.subr.mxu0 0.0
      %1110 = vmatpush1.xpose.msra.mxu0 %v765
      %1111 = vmatprep.subr.mxu0 0.0
      %1112 = vmatpush1.xpose.msra.mxu0 %v768
      %1113 = vmatprep.subr.mxu0 0.0
      %1114 = vmatpush1.xpose.msra.mxu0 %v771
      %1115 = vmatprep.subr.mxu0 0.0
      %1116 = vmatpush1.xpose.msra.mxu0 %v774
      %1117 = vmatprep.subr.mxu0 0.0
      %1118 = vmatpush1.xpose.msra.mxu0 %v777
      %1119 = vmatprep.subr.mxu0 0.0
      %1120 = vmatpush1.xpose.msra.mxu0 %v780
      %1121 = vmatprep.subr.mxu0 0.0
      %1122 = vmatpush1.xpose.msra.mxu0 %v783
      %1123 = vmatprep.subr.mxu0 0.0
      %1124 = vmatpush1.xpose.msra.mxu0 %v786
      %1125 = vmatprep.subr.mxu0 0.0
      %1126 = vmatpush1.xpose.msra.mxu0 %v789
      %1127 = vmatprep.subr.mxu0 0.0
      %1128 = vmatpush1.xpose.msra.mxu0 %v792
      %1129 = vmatprep.subr.mxu0 0.0
      %1130 = vmatpush1.xpose.msra.mxu0 %v795
      %1131 = vmatprep.subr.mxu0 0.0
      %1132 = vmatpush1.xpose.msra.mxu0 %v798
      %1133 = vmatprep.subr.mxu0 0.0
      %1134 = vmatpush1.xpose.msra.mxu0 %v801
      %1135 = vmatprep.subr.mxu0 0.0
      %1136 = vmatpush1.xpose.msra.mxu0 %v804
      %1137 = vmatprep.subr.mxu0 0.0
      %1138 = vmatpush1.xpose.msra.mxu0 %v807
      %1139 = vmatprep.subr.mxu0 0.0
      %1140 = vmatpush1.xpose.msra.mxu0 %v810
      %1141 = vmatprep.subr.mxu0 0.0
      %1142 = vmatpush1.xpose.msra.mxu0 %v813
      %1143 = vmatprep.subr.mxu0 0.0
      %1144 = vmatpush1.xpose.msra.mxu0 %v816
      %1145 = vmatprep.subr.mxu0 0.0
      %1146 = vmatpush1.xpose.msra.mxu0 %v819
      %1147 = vmatprep.subr.mxu0 0.0
      %1148 = vmatpush1.xpose.msra.mxu0 %v822
      %1149 = vmatprep.mubr.f32.mxu0 0.0
      %1150 = vmatmul.mubr.f32.gmra.mrb[0].mxu0 %v438
      %v1151 = vpop.f32.mrb[0].mxu0
      %v1152 = vadd.f32 %v418, %v1151
      %v1153 = vpop.f32.mrb[0].mxu0
      %v1154 = vadd.f32 %v422, %v1153
      %1155 = vdwg.mxu0
      %1156 = vmatprep.subr.mxu0 0.0
      %1157 = vmatpush1.xpose.msra.mxu0 %v825
      %1158 = vmatprep.subr.mxu0 0.0
      %1159 = vmatpush1.xpose.msra.mxu0 %v828
      %1160 = vmatprep.subr.mxu0 0.0
      %1161 = vmatpush1.xpose.msra.mxu0 %v831
      %1162 = vmatprep.subr.mxu0 0.0
      %1163 = vmatpush1.xpose.msra.mxu0 %v834
      %1164 = vmatprep.subr.mxu0 0.0
      %1165 = vmatpush1.xpose.msra.mxu0 %v837
      %1166 = vmatprep.subr.mxu0 0.0
      %1167 = vmatpush1.xpose.msra.mxu0 %v840
      %1168 = vmatprep.subr.mxu0 0.0
      %1169 = vmatpush1.xpose.msra.mxu0 %v843
      %1170 = vmatprep.subr.mxu0 0.0
      %1171 = vmatpush1.xpose.msra.mxu0 %v846
      %1172 = vmatprep.subr.mxu0 0.0
      %1173 = vmatpush1.xpose.msra.mxu0 %v849
      %1174 = vmatprep.subr.mxu0 0.0
      %1175 = vmatpush1.xpose.msra.mxu0 %v852
      %1176 = vmatprep.subr.mxu0 0.0
      %1177 = vmatpush1.xpose.msra.mxu0 %v855
      %1178 = vmatprep.subr.mxu0 0.0
      %1179 = vmatpush1.xpose.msra.mxu0 %v858
      %1180 = vmatprep.subr.mxu0 0.0
      %1181 = vmatpush1.xpose.msra.mxu0 %v861
      %1182 = vmatprep.subr.mxu0 0.0
      %1183 = vmatpush1.xpose.msra.mxu0 %v864
      %1184 = vmatprep.subr.mxu0 0.0
      %1185 = vmatpush1.xpose.msra.mxu0 %v867
      %1186 = vmatprep.subr.mxu0 0.0
      %1187 = vmatpush1.xpose.msra.mxu0 %v870
      %1188 = vmatprep.subr.mxu0 0.0
      %1189 = vmatpush1.xpose.msra.mxu0 0.0
      %1190 = vmatprep.subr.mxu0 0.0
      %1191 = vmatpush1.xpose.msra.mxu0 0.0
      %1192 = vmatprep.subr.mxu0 0.0
      %1193 = vmatpush1.xpose.msra.mxu0 0.0
      %1194 = vmatprep.subr.mxu0 0.0
      %1195 = vmatpush1.xpose.msra.mxu0 0.0
      %1196 = vmatprep.subr.mxu0 0.0
      %1197 = vmatpush1.xpose.msra.mxu0 0.0
      %1198 = vmatprep.subr.mxu0 0.0
      %1199 = vmatpush1.xpose.msra.mxu0 0.0
      %1200 = vmatprep.subr.mxu0 0.0
      %1201 = vmatpush1.xpose.msra.mxu0 0.0
      %1202 = vmatprep.subr.mxu0 0.0
      %1203 = vmatpush1.xpose.msra.mxu0 0.0
      %1204 = vmatprep.subr.mxu0 0.0
      %1205 = vmatpush1.xpose.msra.mxu0 0.0
      %1206 = vmatprep.subr.mxu0 0.0
      %1207 = vmatpush1.xpose.msra.mxu0 0.0
      %1208 = vmatprep.subr.mxu0 0.0
      %1209 = vmatpush1.xpose.msra.mxu0 0.0
      %1210 = vmatprep.subr.mxu0 0.0
      %1211 = vmatpush1.xpose.msra.mxu0 0.0
      %1212 = vmatprep.subr.mxu0 0.0
      %1213 = vmatpush1.xpose.msra.mxu0 0.0
      %1214 = vmatprep.subr.mxu0 0.0
      %1215 = vmatpush1.xpose.msra.mxu0 0.0
      %1216 = vmatprep.subr.mxu0 0.0
      %1217 = vmatpush1.xpose.msra.mxu0 0.0
      %1218 = vmatprep.subr.mxu0 0.0
      %1219 = vmatpush1.xpose.msra.mxu0 0.0
      %1220 = vmatprep.mubr.f32.mxu0 0.0
      %1221 = vmatmul.mubr.f32.gmra.mrb[0].mxu0 %v438
      %v1222 = vpop.f32.mrb[0].mxu0
      %v1223 = vadd.f32 %v426, %v1222
      %v1224 = vpop.f32.mrb[0].mxu0
      %1225 = vdwg.mxu0
      %v1226 = vxor.u32 %v939, 2147483648
      %v1227 = vxor.u32 %v941, 2147483648
      %v1228 = vxor.u32 %v1010, 2147483648
      %v1229 = vxor.u32 %v1012, 2147483648
      %v1230 = vxor.u32 %v1081, 2147483648
      %v1231 = vxor.u32 %v1083, 2147483648
      %v1232 = vxor.u32 %v1152, 2147483648
      %v1233 = vxor.u32 %v1154, 2147483648
      %v1234 = vxor.u32 %v1223, 2147483648
      %v1235 = vmul.f32 %v1226, 1.442695
      %v1236 = vpow.pop %v1235
      %v1237 = vmul.f32 %v1227, 1.442695
      %v1238 = vpow.pop %v1237
      %v1239 = vmul.f32 %v1228, 1.442695
      %v1240 = vpow.pop %v1239
      %v1241 = vmul.f32 %v1229, 1.442695
      %v1242 = vpow.pop %v1241
      %v1243 = vmul.f32 %v1230, 1.442695
      %v1244 = vpow.pop %v1243
      %v1245 = vmul.f32 %v1231, 1.442695
      %v1246 = vpow.pop %v1245
      %v1247 = vmul.f32 %v1232, 1.442695
      %v1248 = vpow.pop %v1247
      %v1249 = vmul.f32 %v1233, 1.442695
      %v1250 = vpow.pop %v1249
      %v1251 = vmul.f32 %v1234, 1.442695
      %v1252 = vpow.pop %v1251
      %v1253 = vadd.f32 %v1236, 1.0
      %v1254 = vadd.f32 %v1238, 1.0
      %v1255 = vadd.f32 %v1240, 1.0
      %v1256 = vadd.f32 %v1242, 1.0
      %v1257 = vadd.f32 %v1244, 1.0
      %v1258 = vadd.f32 %v1246, 1.0
      %v1259 = vadd.f32 %v1248, 1.0
      %v1260 = vadd.f32 %v1250, 1.0
      %v1261 = vadd.f32 %v1252, 1.0
      %v1262 = vrcp.pop %v1253
      %v1263 = vmul.f32 1.0, %v1262
      %v1264 = vrcp.pop %v1254
      %v1265 = vmul.f32 1.0, %v1264
      %v1266 = vrcp.pop %v1255
      %v1267 = vmul.f32 1.0, %v1266
      %v1268 = vrcp.pop %v1256
      %v1269 = vmul.f32 1.0, %v1268
      %v1270 = vrcp.pop %v1257
      %v1271 = vmul.f32 1.0, %v1270
      %v1272 = vrcp.pop %v1258
      %v1273 = vmul.f32 1.0, %v1272
      %v1274 = vrcp.pop %v1259
      %v1275 = vmul.f32 1.0, %v1274
      %v1276 = vrcp.pop %v1260
      %v1277 = vmul.f32 1.0, %v1276
      %v1278 = vrcp.pop %v1261
      %v1279 = vmul.f32 1.0, %v1278
      %1280 = vxpose.xlu0.b32.start [1/16] %v1263, 128
      %1281 = vxpose.xlu0.b32.cont [2/16] 0.0, 128
      %1282 = vxpose.xlu0.b32.cont [3/16] 0.0, 128
      %1283 = vxpose.xlu0.b32.cont [4/16] 0.0, 128
      %1284 = vxpose.xlu0.b32.cont [5/16] 0.0, 128
      %1285 = vxpose.xlu0.b32.cont [6/16] 0.0, 128
      %1286 = vxpose.xlu0.b32.cont [7/16] 0.0, 128
      %1287 = vxpose.xlu0.b32.cont [8/16] 0.0, 128
      %1288 = vxpose.xlu0.b32.cont [9/16] 0.0, 128
      %1289 = vxpose.xlu0.b32.cont [10/16] 0.0, 128
      %1290 = vxpose.xlu0.b32.cont [11/16] 0.0, 128
      %1291 = vxpose.xlu0.b32.cont [12/16] 0.0, 128
      %1292 = vxpose.xlu0.b32.cont [13/16] 0.0, 128
      %1293 = vxpose.xlu0.b32.cont [14/16] 0.0, 128
      %1294 = vxpose.xlu0.b32.cont [15/16] 0.0, 128
      %1295 = vxpose.xlu0.b32.end [16/16] 0.0, 128
      %v1296 = vpop.trf.xlu0
      %v1297 = vpop.trf.xlu0
      %v1298 = vpop.trf.xlu0
      %v1299 = vpop.trf.xlu0
      %v1300 = vpop.trf.xlu0
      %v1301 = vpop.trf.xlu0
      %v1302 = vpop.trf.xlu0
      %v1303 = vpop.trf.xlu0
      %v1304 = vpop.trf.xlu0
      %v1305 = vpop.trf.xlu0
      %v1306 = vpop.trf.xlu0
      %v1307 = vpop.trf.xlu0
      %v1308 = vpop.trf.xlu0
      %v1309 = vpop.trf.xlu0
      %v1310 = vpop.trf.xlu0
      %v1311 = vpop.trf.xlu0
      %1312 = vxpose.xlu0.b32.start [1/16] %v1265, 128
      %1313 = vxpose.xlu0.b32.cont [2/16] 0.0, 128
      %1314 = vxpose.xlu0.b32.cont [3/16] 0.0, 128
      %1315 = vxpose.xlu0.b32.cont [4/16] 0.0, 128
      %1316 = vxpose.xlu0.b32.cont [5/16] 0.0, 128
      %1317 = vxpose.xlu0.b32.cont [6/16] 0.0, 128
      %1318 = vxpose.xlu0.b32.cont [7/16] 0.0, 128
      %1319 = vxpose.xlu0.b32.cont [8/16] 0.0, 128
      %1320 = vxpose.xlu0.b32.cont [9/16] 0.0, 128
      %1321 = vxpose.xlu0.b32.cont [10/16] 0.0, 128
      %1322 = vxpose.xlu0.b32.cont [11/16] 0.0, 128
      %1323 = vxpose.xlu0.b32.cont [12/16] 0.0, 128
      %1324 = vxpose.xlu0.b32.cont [13/16] 0.0, 128
      %1325 = vxpose.xlu0.b32.cont [14/16] 0.0, 128
      %1326 = vxpose.xlu0.b32.cont [15/16] 0.0, 128
      %1327 = vxpose.xlu0.b32.end [16/16] 0.0, 128
      %v1328 = vpop.trf.xlu0
      %v1329 = vpop.trf.xlu0
      %v1330 = vpop.trf.xlu0
      %v1331 = vpop.trf.xlu0
      %v1332 = vpop.trf.xlu0
      %v1333 = vpop.trf.xlu0
      %v1334 = vpop.trf.xlu0
      %v1335 = vpop.trf.xlu0
      %v1336 = vpop.trf.xlu0
      %v1337 = vpop.trf.xlu0
      %v1338 = vpop.trf.xlu0
      %v1339 = vpop.trf.xlu0
      %v1340 = vpop.trf.xlu0
      %v1341 = vpop.trf.xlu0
      %v1342 = vpop.trf.xlu0
      %v1343 = vpop.trf.xlu0
      %1344 = vxpose.xlu0.b32.start [1/16] %v1267, 128
      %1345 = vxpose.xlu0.b32.cont [2/16] 0.0, 128
      %1346 = vxpose.xlu0.b32.cont [3/16] 0.0, 128
      %1347 = vxpose.xlu0.b32.cont [4/16] 0.0, 128
      %1348 = vxpose.xlu0.b32.cont [5/16] 0.0, 128
      %1349 = vxpose.xlu0.b32.cont [6/16] 0.0, 128
      %1350 = vxpose.xlu0.b32.cont [7/16] 0.0, 128
      %1351 = vxpose.xlu0.b32.cont [8/16] 0.0, 128
      %1352 = vxpose.xlu0.b32.cont [9/16] 0.0, 128
      %1353 = vxpose.xlu0.b32.cont [10/16] 0.0, 128
      %1354 = vxpose.xlu0.b32.cont [11/16] 0.0, 128
      %1355 = vxpose.xlu0.b32.cont [12/16] 0.0, 128
      %1356 = vxpose.xlu0.b32.cont [13/16] 0.0, 128
      %1357 = vxpose.xlu0.b32.cont [14/16] 0.0, 128
      %1358 = vxpose.xlu0.b32.cont [15/16] 0.0, 128
      %1359 = vxpose.xlu0.b32.end [16/16] 0.0, 128
      %v1360 = vpop.trf.xlu0
      %v1361 = vpop.trf.xlu0
      %v1362 = vpop.trf.xlu0
      %v1363 = vpop.trf.xlu0
      %v1364 = vpop.trf.xlu0
      %v1365 = vpop.trf.xlu0
      %v1366 = vpop.trf.xlu0
      %v1367 = vpop.trf.xlu0
      %v1368 = vpop.trf.xlu0
      %v1369 = vpop.trf.xlu0
      %v1370 = vpop.trf.xlu0
      %v1371 = vpop.trf.xlu0
      %v1372 = vpop.trf.xlu0
      %v1373 = vpop.trf.xlu0
      %v1374 = vpop.trf.xlu0
      %v1375 = vpop.trf.xlu0
      %1376 = vxpose.xlu0.b32.start [1/16] %v1269, 128
      %1377 = vxpose.xlu0.b32.cont [2/16] 0.0, 128
      %1378 = vxpose.xlu0.b32.cont [3/16] 0.0, 128
      %1379 = vxpose.xlu0.b32.cont [4/16] 0.0, 128
      %1380 = vxpose.xlu0.b32.cont [5/16] 0.0, 128
      %1381 = vxpose.xlu0.b32.cont [6/16] 0.0, 128
      %1382 = vxpose.xlu0.b32.cont [7/16] 0.0, 128
      %1383 = vxpose.xlu0.b32.cont [8/16] 0.0, 128
      %1384 = vxpose.xlu0.b32.cont [9/16] 0.0, 128
      %1385 = vxpose.xlu0.b32.cont [10/16] 0.0, 128
      %1386 = vxpose.xlu0.b32.cont [11/16] 0.0, 128
      %1387 = vxpose.xlu0.b32.cont [12/16] 0.0, 128
      %1388 = vxpose.xlu0.b32.cont [13/16] 0.0, 128
      %1389 = vxpose.xlu0.b32.cont [14/16] 0.0, 128
      %1390 = vxpose.xlu0.b32.cont [15/16] 0.0, 128
      %1391 = vxpose.xlu0.b32.end [16/16] 0.0, 128
      %v1392 = vpop.trf.xlu0
      %v1393 = vpop.trf.xlu0
      %v1394 = vpop.trf.xlu0
      %v1395 = vpop.trf.xlu0
      %v1396 = vpop.trf.xlu0
      %v1397 = vpop.trf.xlu0
      %v1398 = vpop.trf.xlu0
      %v1399 = vpop.trf.xlu0
      %v1400 = vpop.trf.xlu0
      %v1401 = vpop.trf.xlu0
      %v1402 = vpop.trf.xlu0
      %v1403 = vpop.trf.xlu0
      %v1404 = vpop.trf.xlu0
      %v1405 = vpop.trf.xlu0
      %v1406 = vpop.trf.xlu0
      %v1407 = vpop.trf.xlu0
      %1408 = vxpose.xlu0.b32.start [1/16] %v1271, 128
      %1409 = vxpose.xlu0.b32.cont [2/16] 0.0, 128
      %1410 = vxpose.xlu0.b32.cont [3/16] 0.0, 128
      %1411 = vxpose.xlu0.b32.cont [4/16] 0.0, 128
      %1412 = vxpose.xlu0.b32.cont [5/16] 0.0, 128
      %1413 = vxpose.xlu0.b32.cont [6/16] 0.0, 128
      %1414 = vxpose.xlu0.b32.cont [7/16] 0.0, 128
      %1415 = vxpose.xlu0.b32.cont [8/16] 0.0, 128
      %1416 = vxpose.xlu0.b32.cont [9/16] 0.0, 128
      %1417 = vxpose.xlu0.b32.cont [10/16] 0.0, 128
      %1418 = vxpose.xlu0.b32.cont [11/16] 0.0, 128
      %1419 = vxpose.xlu0.b32.cont [12/16] 0.0, 128
      %1420 = vxpose.xlu0.b32.cont [13/16] 0.0, 128
      %1421 = vxpose.xlu0.b32.cont [14/16] 0.0, 128
      %1422 = vxpose.xlu0.b32.cont [15/16] 0.0, 128
      %1423 = vxpose.xlu0.b32.end [16/16] 0.0, 128
      %v1424 = vpop.trf.xlu0
      %v1425 = vpop.trf.xlu0
      %v1426 = vpop.trf.xlu0
      %v1427 = vpop.trf.xlu0
      %v1428 = vpop.trf.xlu0
      %v1429 = vpop.trf.xlu0
      %v1430 = vpop.trf.xlu0
      %v1431 = vpop.trf.xlu0
      %v1432 = vpop.trf.xlu0
      %v1433 = vpop.trf.xlu0
      %v1434 = vpop.trf.xlu0
      %v1435 = vpop.trf.xlu0
      %v1436 = vpop.trf.xlu0
      %v1437 = vpop.trf.xlu0
      %v1438 = vpop.trf.xlu0
      %v1439 = vpop.trf.xlu0
      %1440 = vxpose.xlu0.b32.start [1/16] %v1273, 128
      %1441 = vxpose.xlu0.b32.cont [2/16] 0.0, 128
      %1442 = vxpose.xlu0.b32.cont [3/16] 0.0, 128
      %1443 = vxpose.xlu0.b32.cont [4/16] 0.0, 128
      %1444 = vxpose.xlu0.b32.cont [5/16] 0.0, 128
      %1445 = vxpose.xlu0.b32.cont [6/16] 0.0, 128
      %1446 = vxpose.xlu0.b32.cont [7/16] 0.0, 128
      %1447 = vxpose.xlu0.b32.cont [8/16] 0.0, 128
      %1448 = vxpose.xlu0.b32.cont [9/16] 0.0, 128
      %1449 = vxpose.xlu0.b32.cont [10/16] 0.0, 128
      %1450 = vxpose.xlu0.b32.cont [11/16] 0.0, 128
      %1451 = vxpose.xlu0.b32.cont [12/16] 0.0, 128
      %1452 = vxpose.xlu0.b32.cont [13/16] 0.0, 128
      %1453 = vxpose.xlu0.b32.cont [14/16] 0.0, 128
      %1454 = vxpose.xlu0.b32.cont [15/16] 0.0, 128
      %1455 = vxpose.xlu0.b32.end [16/16] 0.0, 128
      %v1456 = vpop.trf.xlu0
      %v1457 = vpop.trf.xlu0
      %v1458 = vpop.trf.xlu0
      %v1459 = vpop.trf.xlu0
      %v1460 = vpop.trf.xlu0
      %v1461 = vpop.trf.xlu0
      %v1462 = vpop.trf.xlu0
      %v1463 = vpop.trf.xlu0
      %v1464 = vpop.trf.xlu0
      %v1465 = vpop.trf.xlu0
      %v1466 = vpop.trf.xlu0
      %v1467 = vpop.trf.xlu0
      %v1468 = vpop.trf.xlu0
      %v1469 = vpop.trf.xlu0
      %v1470 = vpop.trf.xlu0
      %v1471 = vpop.trf.xlu0
      %1472 = vxpose.xlu0.b32.start [1/16] %v1275, 128
      %1473 = vxpose.xlu0.b32.cont [2/16] 0.0, 128
      %1474 = vxpose.xlu0.b32.cont [3/16] 0.0, 128
      %1475 = vxpose.xlu0.b32.cont [4/16] 0.0, 128
      %1476 = vxpose.xlu0.b32.cont [5/16] 0.0, 128
      %1477 = vxpose.xlu0.b32.cont [6/16] 0.0, 128
      %1478 = vxpose.xlu0.b32.cont [7/16] 0.0, 128
      %1479 = vxpose.xlu0.b32.cont [8/16] 0.0, 128
      %1480 = vxpose.xlu0.b32.cont [9/16] 0.0, 128
      %1481 = vxpose.xlu0.b32.cont [10/16] 0.0, 128
      %1482 = vxpose.xlu0.b32.cont [11/16] 0.0, 128
      %1483 = vxpose.xlu0.b32.cont [12/16] 0.0, 128
      %1484 = vxpose.xlu0.b32.cont [13/16] 0.0, 128
      %1485 = vxpose.xlu0.b32.cont [14/16] 0.0, 128
      %1486 = vxpose.xlu0.b32.cont [15/16] 0.0, 128
      %1487 = vxpose.xlu0.b32.end [16/16] 0.0, 128
      %v1488 = vpop.trf.xlu0
      %v1489 = vpop.trf.xlu0
      %v1490 = vpop.trf.xlu0
      %v1491 = vpop.trf.xlu0
      %v1492 = vpop.trf.xlu0
      %v1493 = vpop.trf.xlu0
      %v1494 = vpop.trf.xlu0
      %v1495 = vpop.trf.xlu0
      %v1496 = vpop.trf.xlu0
      %v1497 = vpop.trf.xlu0
      %v1498 = vpop.trf.xlu0
      %v1499 = vpop.trf.xlu0
      %v1500 = vpop.trf.xlu0
      %v1501 = vpop.trf.xlu0
      %v1502 = vpop.trf.xlu0
      %v1503 = vpop.trf.xlu0
      %1504 = vxpose.xlu0.b32.start [1/16] %v1277, 128
      %1505 = vxpose.xlu0.b32.cont [2/16] 0.0, 128
      %1506 = vxpose.xlu0.b32.cont [3/16] 0.0, 128
      %1507 = vxpose.xlu0.b32.cont [4/16] 0.0, 128
      %1508 = vxpose.xlu0.b32.cont [5/16] 0.0, 128
      %1509 = vxpose.xlu0.b32.cont [6/16] 0.0, 128
      %1510 = vxpose.xlu0.b32.cont [7/16] 0.0, 128
      %1511 = vxpose.xlu0.b32.cont [8/16] 0.0, 128
      %1512 = vxpose.xlu0.b32.cont [9/16] 0.0, 128
      %1513 = vxpose.xlu0.b32.cont [10/16] 0.0, 128
      %1514 = vxpose.xlu0.b32.cont [11/16] 0.0, 128
      %1515 = vxpose.xlu0.b32.cont [12/16] 0.0, 128
      %1516 = vxpose.xlu0.b32.cont [13/16] 0.0, 128
      %1517 = vxpose.xlu0.b32.cont [14/16] 0.0, 128
      %1518 = vxpose.xlu0.b32.cont [15/16] 0.0, 128
      %1519 = vxpose.xlu0.b32.end [16/16] 0.0, 128
      %v1520 = vpop.trf.xlu0
      %v1521 = vpop.trf.xlu0
      %v1522 = vpop.trf.xlu0
      %v1523 = vpop.trf.xlu0
      %v1524 = vpop.trf.xlu0
      %v1525 = vpop.trf.xlu0
      %v1526 = vpop.trf.xlu0
      %v1527 = vpop.trf.xlu0
      %v1528 = vpop.trf.xlu0
      %v1529 = vpop.trf.xlu0
      %v1530 = vpop.trf.xlu0
      %v1531 = vpop.trf.xlu0
      %v1532 = vpop.trf.xlu0
      %v1533 = vpop.trf.xlu0
      %v1534 = vpop.trf.xlu0
      %v1535 = vpop.trf.xlu0
      %1536 = vxpose.xlu0.b32.start [1/16] %v1279, 128
      %1537 = vxpose.xlu0.b32.cont [2/16] 0.0, 128
      %1538 = vxpose.xlu0.b32.cont [3/16] 0.0, 128
      %1539 = vxpose.xlu0.b32.cont [4/16] 0.0, 128
      %1540 = vxpose.xlu0.b32.cont [5/16] 0.0, 128
      %1541 = vxpose.xlu0.b32.cont [6/16] 0.0, 128
      %1542 = vxpose.xlu0.b32.cont [7/16] 0.0, 128
      %1543 = vxpose.xlu0.b32.cont [8/16] 0.0, 128
      %1544 = vxpose.xlu0.b32.cont [9/16] 0.0, 128
      %1545 = vxpose.xlu0.b32.cont [10/16] 0.0, 128
      %1546 = vxpose.xlu0.b32.cont [11/16] 0.0, 128
      %1547 = vxpose.xlu0.b32.cont [12/16] 0.0, 128
      %1548 = vxpose.xlu0.b32.cont [13/16] 0.0, 128
      %1549 = vxpose.xlu0.b32.cont [14/16] 0.0, 128
      %1550 = vxpose.xlu0.b32.cont [15/16] 0.0, 128
      %1551 = vxpose.xlu0.b32.end [16/16] 0.0, 128
      %v1552 = vpop.trf.xlu0
      %v1553 = vpop.trf.xlu0
      %v1554 = vpop.trf.xlu0
      %v1555 = vpop.trf.xlu0
      %v1556 = vpop.trf.xlu0
      %v1557 = vpop.trf.xlu0
      %v1558 = vpop.trf.xlu0
      %v1559 = vpop.trf.xlu0
      %v1560 = vpop.trf.xlu0
      %v1561 = vpop.trf.xlu0
      %v1562 = vpop.trf.xlu0
      %v1563 = vpop.trf.xlu0
      %v1564 = vpop.trf.xlu0
      %v1565 = vpop.trf.xlu0
      %v1566 = vpop.trf.xlu0
      %v1567 = vpop.trf.xlu0
      %v1568 = vld [vmem:[%s234] sm:$0xff]
      %v1569 = vld [vmem:[%s234 + $0x8] sm:$0xff]
      %v1570 = vld [vmem:[%s234 + $0x10] sm:$0xff]
      %v1571 = vld [vmem:[%s234 + $0x18] sm:$0xff]
      %v1572 = vld [vmem:[%s234 + $0x20] sm:$0xff]
      %v1573 = vld [vmem:[%s234 + $0x28] sm:$0xff]
      %v1574 = vld [vmem:[%s234 + $0x30] sm:$0xff]
      %v1575 = vld [vmem:[%s234 + $0x38] sm:$0xff]
      %v1576 = vld [vmem:[%s234 + $0x40] sm:$0xff]
      %v1577 = vld [vmem:[%s234 + $0x48] sm:$0xff]
      %v1578 = vld [vmem:[%s234 + $0x50] sm:$0xff]
      %v1579 = vld [vmem:[%s234 + $0x58] sm:$0xff]
      %v1580 = vld [vmem:[%s234 + $0x60] sm:$0xff]
      %v1581 = vld [vmem:[%s234 + $0x68] sm:$0xff]
      %v1582 = vld [vmem:[%s234 + $0x70] sm:$0xff]
      %v1583 = vld [vmem:[%s234 + $0x78] sm:$0xff]
      %v1584 = vld [vmem:[%s234 + $0x80] sm:$0xff]
      %v1585 = vld [vmem:[%s234 + $0x88] sm:$0xff]
      %v1586 = vld [vmem:[%s234 + $0x90] sm:$0xff]
      %v1587 = vld [vmem:[%s234 + $0x98] sm:$0xff]
      %v1588 = vld [vmem:[%s234 + $0xa0] sm:$0xff]
      %v1589 = vld [vmem:[%s234 + $0xa8] sm:$0xff]
      %v1590 = vld [vmem:[%s234 + $0xb0] sm:$0xff]
      %v1591 = vld [vmem:[%s234 + $0xb8] sm:$0xff]
      %v1592 = vld [vmem:[%s234 + $0xc0] sm:$0xff]
      %v1593 = vld [vmem:[%s234 + $0xc8] sm:$0xff]
      %v1594 = vld [vmem:[%s234 + $0xd0] sm:$0xff]
      %v1595 = vld [vmem:[%s234 + $0xd8] sm:$0xff]
      %v1596 = vld [vmem:[%s234 + $0xe0] sm:$0xff]
      %v1597 = vld [vmem:[%s234 + $0xe8] sm:$0xff]
      %v1598 = vld [vmem:[%s234 + $0xf0] sm:$0xff]
      %v1599 = vld [vmem:[%s234 + $0xf8] sm:$0xff]
      %v1600 = vld [vmem:[%s234 + $0x100] sm:$0xff]
      %v1601 = vld [vmem:[%s234 + $0x108] sm:$0xff]
      %v1602 = vld [vmem:[%s234 + $0x110] sm:$0xff]
      %v1603 = vld [vmem:[%s234 + $0x118] sm:$0xff]
      %v1604 = vld [vmem:[%s234 + $0x120] sm:$0xff]
      %v1605 = vld [vmem:[%s234 + $0x128] sm:$0xff]
      %v1606 = vld [vmem:[%s234 + $0x130] sm:$0xff]
      %v1607 = vld [vmem:[%s234 + $0x138] sm:$0xff]
      %v1608 = vld [vmem:[%s234 + $0x140] sm:$0xff]
      %v1609 = vld [vmem:[%s234 + $0x148] sm:$0xff]
      %v1610 = vld [vmem:[%s234 + $0x150] sm:$0xff]
      %v1611 = vld [vmem:[%s234 + $0x158] sm:$0xff]
      %v1612 = vld [vmem:[%s234 + $0x160] sm:$0xff]
      %v1613 = vld [vmem:[%s234 + $0x168] sm:$0xff]
      %v1614 = vld [vmem:[%s234 + $0x170] sm:$0xff]
      %v1615 = vld [vmem:[%s234 + $0x178] sm:$0xff]
      %v1616 = vld [vmem:[%s234 + $0x180] sm:$0xff]
      %v1617 = vld [vmem:[%s234 + $0x188] sm:$0xff]
      %v1618 = vld [vmem:[%s234 + $0x190] sm:$0xff]
      %v1619 = vld [vmem:[%s234 + $0x198] sm:$0xff]
      %v1620 = vld [vmem:[%s234 + $0x1a0] sm:$0xff]
      %v1621 = vld [vmem:[%s234 + $0x1a8] sm:$0xff]
      %v1622 = vld [vmem:[%s234 + $0x1b0] sm:$0xff]
      %v1623 = vld [vmem:[%s234 + $0x1b8] sm:$0xff]
      %v1624 = vld [vmem:[%s234 + $0x1c0] sm:$0xff]
      %v1625 = vld [vmem:[%s234 + $0x1c8] sm:$0xff]
      %v1626 = vld [vmem:[%s234 + $0x1d0] sm:$0xff]
      %v1627 = vld [vmem:[%s234 + $0x1d8] sm:$0xff]
      %v1628 = vld [vmem:[%s234 + $0x1e0] sm:$0xff]
      %v1629 = vld [vmem:[%s234 + $0x1e8] sm:$0xff]
      %v1630 = vld [vmem:[%s234 + $0x1f0] sm:$0xff]
      %v1631 = vld [vmem:[%s234 + $0x1f8] sm:$0xff]
      %v1632 = vld [vmem:[%s234 + $0x200] sm:$0xff]
      %v1633 = vld [vmem:[%s234 + $0x208] sm:$0xff]
      %v1634 = vld [vmem:[%s234 + $0x210] sm:$0xff]
      %v1635 = vld [vmem:[%s234 + $0x218] sm:$0xff]
      %v1636 = vld [vmem:[%s234 + $0x220] sm:$0xff]
      %v1637 = vld [vmem:[%s234 + $0x228] sm:$0xff]
      %v1638 = vld [vmem:[%s234 + $0x230] sm:$0xff]
      %v1639 = vld [vmem:[%s234 + $0x238] sm:$0xff]
      %v1640 = vld [vmem:[%s234 + $0x240] sm:$0xff]
      %v1641 = vld [vmem:[%s234 + $0x248] sm:$0xff]
      %v1642 = vld [vmem:[%s234 + $0x250] sm:$0xff]
      %v1643 = vld [vmem:[%s234 + $0x258] sm:$0xff]
      %v1644 = vld [vmem:[%s234 + $0x260] sm:$0xff]
      %v1645 = vld [vmem:[%s234 + $0x268] sm:$0xff]
      %v1646 = vld [vmem:[%s234 + $0x270] sm:$0xff]
      %v1647 = vld [vmem:[%s234 + $0x278] sm:$0xff]
      %v1648 = vld [vmem:[%s234 + $0x280] sm:$0xff]
      %v1649 = vld [vmem:[%s234 + $0x288] sm:$0xff]
      %v1650 = vld [vmem:[%s234 + $0x290] sm:$0xff]
      %v1651 = vld [vmem:[%s234 + $0x298] sm:$0xff]
      %v1652 = vld [vmem:[%s234 + $0x2a0] sm:$0xff]
      %v1653 = vld [vmem:[%s234 + $0x2a8] sm:$0xff]
      %v1654 = vld [vmem:[%s234 + $0x2b0] sm:$0xff]
      %v1655 = vld [vmem:[%s234 + $0x2b8] sm:$0xff]
      %v1656 = vld [vmem:[%s234 + $0x2c0] sm:$0xff]
      %v1657 = vld [vmem:[%s234 + $0x2c8] sm:$0xff]
      %v1658 = vld [vmem:[%s234 + $0x2d0] sm:$0xff]
      %v1659 = vld [vmem:[%s234 + $0x2d8] sm:$0xff]
      %v1660 = vld [vmem:[%s234 + $0x2e0] sm:$0xff]
      %v1661 = vld [vmem:[%s234 + $0x2e8] sm:$0xff]
      %v1662 = vld [vmem:[%s234 + $0x2f0] sm:$0xff]
      %v1663 = vld [vmem:[%s234 + $0x2f8] sm:$0xff]
      %v1664 = vld [vmem:[%s234 + $0x300] sm:$0xff]
      %v1665 = vld [vmem:[%s234 + $0x308] sm:$0xff]
      %v1666 = vld [vmem:[%s234 + $0x310] sm:$0xff]
      %v1667 = vld [vmem:[%s234 + $0x318] sm:$0xff]
      %v1668 = vld [vmem:[%s234 + $0x320] sm:$0xff]
      %v1669 = vld [vmem:[%s234 + $0x328] sm:$0xff]
      %v1670 = vld [vmem:[%s234 + $0x330] sm:$0xff]
      %v1671 = vld [vmem:[%s234 + $0x338] sm:$0xff]
      %v1672 = vld [vmem:[%s234 + $0x340] sm:$0xff]
      %v1673 = vld [vmem:[%s234 + $0x348] sm:$0xff]
      %v1674 = vld [vmem:[%s234 + $0x350] sm:$0xff]
      %v1675 = vld [vmem:[%s234 + $0x358] sm:$0xff]
      %v1676 = vld [vmem:[%s234 + $0x360] sm:$0xff]
      %v1677 = vld [vmem:[%s234 + $0x368] sm:$0xff]
      %v1678 = vld [vmem:[%s234 + $0x370] sm:$0xff]
      %v1679 = vld [vmem:[%s234 + $0x378] sm:$0xff]
      %v1680 = vld [vmem:[%s234 + $0x380] sm:$0xff]
      %v1681 = vld [vmem:[%s234 + $0x388] sm:$0xff]
      %v1682 = vld [vmem:[%s234 + $0x390] sm:$0xff]
      %v1683 = vld [vmem:[%s234 + $0x398] sm:$0xff]
      %v1684 = vld [vmem:[%s234 + $0x3a0] sm:$0xff]
      %v1685 = vld [vmem:[%s234 + $0x3a8] sm:$0xff]
      %v1686 = vld [vmem:[%s234 + $0x3b0] sm:$0xff]
      %v1687 = vld [vmem:[%s234 + $0x3b8] sm:$0xff]
      %v1688 = vld [vmem:[%s234 + $0x3c0] sm:$0xff]
      %v1689 = vld [vmem:[%s234 + $0x3c8] sm:$0xff]
      %v1690 = vld [vmem:[%s234 + $0x3d0] sm:$0xff]
      %v1691 = vld [vmem:[%s234 + $0x3d8] sm:$0xff]
      %v1692 = vld [vmem:[%s234 + $0x3e0] sm:$0xff]
      %v1693 = vld [vmem:[%s234 + $0x3e8] sm:$0xff]
      %v1694 = vld [vmem:[%s234 + $0x3f0] sm:$0xff]
      %v1695 = vld [vmem:[%s234 + $0x3f8] sm:$0xff]
      %v1696 = vld [vmem:[%s234 + $0x400] sm:$0xff]
      %v1697 = vld [vmem:[%s234 + $0x408] sm:$0xff]
      %v1698 = vld [vmem:[%s234 + $0x410] sm:$0xff]
      %v1699 = vld [vmem:[%s234 + $0x418] sm:$0xff]
      %v1700 = vld [vmem:[%s234 + $0x420] sm:$0xff]
      %v1701 = vld [vmem:[%s234 + $0x428] sm:$0xff]
      %v1702 = vld [vmem:[%s234 + $0x430] sm:$0xff]
      %v1703 = vld [vmem:[%s234 + $0x438] sm:$0xff]
      %v1704 = vld [vmem:[%s234 + $0x440] sm:$0xff]
      %v1705 = vld [vmem:[%s234 + $0x448] sm:$0xff]
      %v1706 = vld [vmem:[%s234 + $0x450] sm:$0xff]
      %v1707 = vld [vmem:[%s234 + $0x458] sm:$0xff]
      %v1708 = vld [vmem:[%s234 + $0x460] sm:$0xff]
      %v1709 = vld [vmem:[%s234 + $0x468] sm:$0xff]
      %v1710 = vld [vmem:[%s234 + $0x470] sm:$0xff]
      %v1711 = vld [vmem:[%s234 + $0x478] sm:$0xff]
      %1713 = vset.pattern.permute.xlu0 0
      %1714 = vperm.xlu0 %1713, %v1296
      %v1715 = vpop.permute.xlu0 %1714
      %1718 = vset.pattern.permute.xlu0 0
      %1719 = vperm.xlu0 %1718, %v1297
      %v1720 = vpop.permute.xlu0 %1719
      %1723 = vset.pattern.permute.xlu0 0
      %1724 = vperm.xlu0 %1723, %v1298
      %v1725 = vpop.permute.xlu0 %1724
      %1728 = vset.pattern.permute.xlu0 0
      %1729 = vperm.xlu0 %1728, %v1299
      %v1730 = vpop.permute.xlu0 %1729
      %1733 = vset.pattern.permute.xlu0 0
      %1734 = vperm.xlu0 %1733, %v1300
      %v1735 = vpop.permute.xlu0 %1734
      %1738 = vset.pattern.permute.xlu0 0
      %1739 = vperm.xlu0 %1738, %v1301
      %v1740 = vpop.permute.xlu0 %1739
      %1743 = vset.pattern.permute.xlu0 0
      %1744 = vperm.xlu0 %1743, %v1302
      %v1745 = vpop.permute.xlu0 %1744
      %1748 = vset.pattern.permute.xlu0 0
      %1749 = vperm.xlu0 %1748, %v1303
      %v1750 = vpop.permute.xlu0 %1749
      %1753 = vset.pattern.permute.xlu0 0
      %1754 = vperm.xlu0 %1753, %v1304
      %v1755 = vpop.permute.xlu0 %1754
      %1758 = vset.pattern.permute.xlu0 0
      %1759 = vperm.xlu0 %1758, %v1305
      %v1760 = vpop.permute.xlu0 %1759
      %1763 = vset.pattern.permute.xlu0 0
      %1764 = vperm.xlu0 %1763, %v1306
      %v1765 = vpop.permute.xlu0 %1764
      %1768 = vset.pattern.permute.xlu0 0
      %1769 = vperm.xlu0 %1768, %v1307
      %v1770 = vpop.permute.xlu0 %1769
      %1773 = vset.pattern.permute.xlu0 0
      %1774 = vperm.xlu0 %1773, %v1308
      %v1775 = vpop.permute.xlu0 %1774
      %1778 = vset.pattern.permute.xlu0 0
      %1779 = vperm.xlu0 %1778, %v1309
      %v1780 = vpop.permute.xlu0 %1779
      %1783 = vset.pattern.permute.xlu0 0
      %1784 = vperm.xlu0 %1783, %v1310
      %v1785 = vpop.permute.xlu0 %1784
      %1788 = vset.pattern.permute.xlu0 0
      %1789 = vperm.xlu0 %1788, %v1311
      %v1790 = vpop.permute.xlu0 %1789
      %1793 = vset.pattern.permute.xlu0 0
      %1794 = vperm.xlu0 %1793, %v1328
      %v1795 = vpop.permute.xlu0 %1794
      %1798 = vset.pattern.permute.xlu0 0
      %1799 = vperm.xlu0 %1798, %v1329
      %v1800 = vpop.permute.xlu0 %1799
      %1803 = vset.pattern.permute.xlu0 0
      %1804 = vperm.xlu0 %1803, %v1330
      %v1805 = vpop.permute.xlu0 %1804
      %1808 = vset.pattern.permute.xlu0 0
      %1809 = vperm.xlu0 %1808, %v1331
      %v1810 = vpop.permute.xlu0 %1809
      %1813 = vset.pattern.permute.xlu0 0
      %1814 = vperm.xlu0 %1813, %v1332
      %v1815 = vpop.permute.xlu0 %1814
      %1818 = vset.pattern.permute.xlu0 0
      %1819 = vperm.xlu0 %1818, %v1333
      %v1820 = vpop.permute.xlu0 %1819
      %1823 = vset.pattern.permute.xlu0 0
      %1824 = vperm.xlu0 %1823, %v1334
      %v1825 = vpop.permute.xlu0 %1824
      %1828 = vset.pattern.permute.xlu0 0
      %1829 = vperm.xlu0 %1828, %v1335
      %v1830 = vpop.permute.xlu0 %1829
      %1833 = vset.pattern.permute.xlu0 0
      %1834 = vperm.xlu0 %1833, %v1336
      %v1835 = vpop.permute.xlu0 %1834
      %1838 = vset.pattern.permute.xlu0 0
      %1839 = vperm.xlu0 %1838, %v1337
      %v1840 = vpop.permute.xlu0 %1839
      %1843 = vset.pattern.permute.xlu0 0
      %1844 = vperm.xlu0 %1843, %v1338
      %v1845 = vpop.permute.xlu0 %1844
      %1848 = vset.pattern.permute.xlu0 0
      %1849 = vperm.xlu0 %1848, %v1339
      %v1850 = vpop.permute.xlu0 %1849
      %1853 = vset.pattern.permute.xlu0 0
      %1854 = vperm.xlu0 %1853, %v1340
      %v1855 = vpop.permute.xlu0 %1854
      %1858 = vset.pattern.permute.xlu0 0
      %1859 = vperm.xlu0 %1858, %v1341
      %v1860 = vpop.permute.xlu0 %1859
      %1863 = vset.pattern.permute.xlu0 0
      %1864 = vperm.xlu0 %1863, %v1342
      %v1865 = vpop.permute.xlu0 %1864
      %1868 = vset.pattern.permute.xlu0 0
      %1869 = vperm.xlu0 %1868, %v1343
      %v1870 = vpop.permute.xlu0 %1869
      %1873 = vset.pattern.permute.xlu0 0
      %1874 = vperm.xlu0 %1873, %v1360
      %v1875 = vpop.permute.xlu0 %1874
      %1878 = vset.pattern.permute.xlu0 0
      %1879 = vperm.xlu0 %1878, %v1361
      %v1880 = vpop.permute.xlu0 %1879
      %1883 = vset.pattern.permute.xlu0 0
      %1884 = vperm.xlu0 %1883, %v1362
      %v1885 = vpop.permute.xlu0 %1884
      %1888 = vset.pattern.permute.xlu0 0
      %1889 = vperm.xlu0 %1888, %v1363
      %v1890 = vpop.permute.xlu0 %1889
      %1893 = vset.pattern.permute.xlu0 0
      %1894 = vperm.xlu0 %1893, %v1364
      %v1895 = vpop.permute.xlu0 %1894
      %1898 = vset.pattern.permute.xlu0 0
      %1899 = vperm.xlu0 %1898, %v1365
      %v1900 = vpop.permute.xlu0 %1899
      %1903 = vset.pattern.permute.xlu0 0
      %1904 = vperm.xlu0 %1903, %v1366
      %v1905 = vpop.permute.xlu0 %1904
      %1908 = vset.pattern.permute.xlu0 0
      %1909 = vperm.xlu0 %1908, %v1367
      %v1910 = vpop.permute.xlu0 %1909
      %1913 = vset.pattern.permute.xlu0 0
      %1914 = vperm.xlu0 %1913, %v1368
      %v1915 = vpop.permute.xlu0 %1914
      %1918 = vset.pattern.permute.xlu0 0
      %1919 = vperm.xlu0 %1918, %v1369
      %v1920 = vpop.permute.xlu0 %1919
      %1923 = vset.pattern.permute.xlu0 0
      %1924 = vperm.xlu0 %1923, %v1370
      %v1925 = vpop.permute.xlu0 %1924
      %1928 = vset.pattern.permute.xlu0 0
      %1929 = vperm.xlu0 %1928, %v1371
      %v1930 = vpop.permute.xlu0 %1929
      %1933 = vset.pattern.permute.xlu0 0
      %1934 = vperm.xlu0 %1933, %v1372
      %v1935 = vpop.permute.xlu0 %1934
      %1938 = vset.pattern.permute.xlu0 0
      %1939 = vperm.xlu0 %1938, %v1373
      %v1940 = vpop.permute.xlu0 %1939
      %1943 = vset.pattern.permute.xlu0 0
      %1944 = vperm.xlu0 %1943, %v1374
      %v1945 = vpop.permute.xlu0 %1944
      %1948 = vset.pattern.permute.xlu0 0
      %1949 = vperm.xlu0 %1948, %v1375
      %v1950 = vpop.permute.xlu0 %1949
      %1953 = vset.pattern.permute.xlu0 0
      %1954 = vperm.xlu0 %1953, %v1392
      %v1955 = vpop.permute.xlu0 %1954
      %1958 = vset.pattern.permute.xlu0 0
      %1959 = vperm.xlu0 %1958, %v1393
      %v1960 = vpop.permute.xlu0 %1959
      %1963 = vset.pattern.permute.xlu0 0
      %1964 = vperm.xlu0 %1963, %v1394
      %v1965 = vpop.permute.xlu0 %1964
      %1968 = vset.pattern.permute.xlu0 0
      %1969 = vperm.xlu0 %1968, %v1395
      %v1970 = vpop.permute.xlu0 %1969
      %1973 = vset.pattern.permute.xlu0 0
      %1974 = vperm.xlu0 %1973, %v1396
      %v1975 = vpop.permute.xlu0 %1974
      %1978 = vset.pattern.permute.xlu0 0
      %1979 = vperm.xlu0 %1978, %v1397
      %v1980 = vpop.permute.xlu0 %1979
      %1983 = vset.pattern.permute.xlu0 0
      %1984 = vperm.xlu0 %1983, %v1398
      %v1985 = vpop.permute.xlu0 %1984
      %1988 = vset.pattern.permute.xlu0 0
      %1989 = vperm.xlu0 %1988, %v1399
      %v1990 = vpop.permute.xlu0 %1989
      %1993 = vset.pattern.permute.xlu0 0
      %1994 = vperm.xlu0 %1993, %v1400
      %v1995 = vpop.permute.xlu0 %1994
      %1998 = vset.pattern.permute.xlu0 0
      %1999 = vperm.xlu0 %1998, %v1401
      %v2000 = vpop.permute.xlu0 %1999
      %2003 = vset.pattern.permute.xlu0 0
      %2004 = vperm.xlu0 %2003, %v1402
      %v2005 = vpop.permute.xlu0 %2004
      %2008 = vset.pattern.permute.xlu0 0
      %2009 = vperm.xlu0 %2008, %v1403
      %v2010 = vpop.permute.xlu0 %2009
      %2013 = vset.pattern.permute.xlu0 0
      %2014 = vperm.xlu0 %2013, %v1404
      %v2015 = vpop.permute.xlu0 %2014
      %2018 = vset.pattern.permute.xlu0 0
      %2019 = vperm.xlu0 %2018, %v1405
      %v2020 = vpop.permute.xlu0 %2019
      %2023 = vset.pattern.permute.xlu0 0
      %2024 = vperm.xlu0 %2023, %v1406
      %v2025 = vpop.permute.xlu0 %2024
      %2028 = vset.pattern.permute.xlu0 0
      %2029 = vperm.xlu0 %2028, %v1407
      %v2030 = vpop.permute.xlu0 %2029
      %2033 = vset.pattern.permute.xlu0 0
      %2034 = vperm.xlu0 %2033, %v1424
      %v2035 = vpop.permute.xlu0 %2034
      %2038 = vset.pattern.permute.xlu0 0
      %2039 = vperm.xlu0 %2038, %v1425
      %v2040 = vpop.permute.xlu0 %2039
      %2043 = vset.pattern.permute.xlu0 0
      %2044 = vperm.xlu0 %2043, %v1426
      %v2045 = vpop.permute.xlu0 %2044
      %2048 = vset.pattern.permute.xlu0 0
      %2049 = vperm.xlu0 %2048, %v1427
      %v2050 = vpop.permute.xlu0 %2049
      %2053 = vset.pattern.permute.xlu0 0
      %2054 = vperm.xlu0 %2053, %v1428
      %v2055 = vpop.permute.xlu0 %2054
      %2058 = vset.pattern.permute.xlu0 0
      %2059 = vperm.xlu0 %2058, %v1429
      %v2060 = vpop.permute.xlu0 %2059
      %2063 = vset.pattern.permute.xlu0 0
      %2064 = vperm.xlu0 %2063, %v1430
      %v2065 = vpop.permute.xlu0 %2064
      %2068 = vset.pattern.permute.xlu0 0
      %2069 = vperm.xlu0 %2068, %v1431
      %v2070 = vpop.permute.xlu0 %2069
      %2073 = vset.pattern.permute.xlu0 0
      %2074 = vperm.xlu0 %2073, %v1432
      %v2075 = vpop.permute.xlu0 %2074
      %2078 = vset.pattern.permute.xlu0 0
      %2079 = vperm.xlu0 %2078, %v1433
      %v2080 = vpop.permute.xlu0 %2079
      %2083 = vset.pattern.permute.xlu0 0
      %2084 = vperm.xlu0 %2083, %v1434
      %v2085 = vpop.permute.xlu0 %2084
      %2088 = vset.pattern.permute.xlu0 0
      %2089 = vperm.xlu0 %2088, %v1435
      %v2090 = vpop.permute.xlu0 %2089
      %2093 = vset.pattern.permute.xlu0 0
      %2094 = vperm.xlu0 %2093, %v1436
      %v2095 = vpop.permute.xlu0 %2094
      %2098 = vset.pattern.permute.xlu0 0
      %2099 = vperm.xlu0 %2098, %v1437
      %v2100 = vpop.permute.xlu0 %2099
      %2103 = vset.pattern.permute.xlu0 0
      %2104 = vperm.xlu0 %2103, %v1438
      %v2105 = vpop.permute.xlu0 %2104
      %2108 = vset.pattern.permute.xlu0 0
      %2109 = vperm.xlu0 %2108, %v1439
      %v2110 = vpop.permute.xlu0 %2109
      %2113 = vset.pattern.permute.xlu0 0
      %2114 = vperm.xlu0 %2113, %v1456
      %v2115 = vpop.permute.xlu0 %2114
      %2118 = vset.pattern.permute.xlu0 0
      %2119 = vperm.xlu0 %2118, %v1457
      %v2120 = vpop.permute.xlu0 %2119
      %2123 = vset.pattern.permute.xlu0 0
      %2124 = vperm.xlu0 %2123, %v1458
      %v2125 = vpop.permute.xlu0 %2124
      %2128 = vset.pattern.permute.xlu0 0
      %2129 = vperm.xlu0 %2128, %v1459
      %v2130 = vpop.permute.xlu0 %2129
      %2133 = vset.pattern.permute.xlu0 0
      %2134 = vperm.xlu0 %2133, %v1460
      %v2135 = vpop.permute.xlu0 %2134
      %2138 = vset.pattern.permute.xlu0 0
      %2139 = vperm.xlu0 %2138, %v1461
      %v2140 = vpop.permute.xlu0 %2139
      %2143 = vset.pattern.permute.xlu0 0
      %2144 = vperm.xlu0 %2143, %v1462
      %v2145 = vpop.permute.xlu0 %2144
      %2148 = vset.pattern.permute.xlu0 0
      %2149 = vperm.xlu0 %2148, %v1463
      %v2150 = vpop.permute.xlu0 %2149
      %2153 = vset.pattern.permute.xlu0 0
      %2154 = vperm.xlu0 %2153, %v1464
      %v2155 = vpop.permute.xlu0 %2154
      %2158 = vset.pattern.permute.xlu0 0
      %2159 = vperm.xlu0 %2158, %v1465
      %v2160 = vpop.permute.xlu0 %2159
      %2163 = vset.pattern.permute.xlu0 0
      %2164 = vperm.xlu0 %2163, %v1466
      %v2165 = vpop.permute.xlu0 %2164
      %2168 = vset.pattern.permute.xlu0 0
      %2169 = vperm.xlu0 %2168, %v1467
      %v2170 = vpop.permute.xlu0 %2169
      %2173 = vset.pattern.permute.xlu0 0
      %2174 = vperm.xlu0 %2173, %v1468
      %v2175 = vpop.permute.xlu0 %2174
      %2178 = vset.pattern.permute.xlu0 0
      %2179 = vperm.xlu0 %2178, %v1469
      %v2180 = vpop.permute.xlu0 %2179
      %2183 = vset.pattern.permute.xlu0 0
      %2184 = vperm.xlu0 %2183, %v1470
      %v2185 = vpop.permute.xlu0 %2184
      %2188 = vset.pattern.permute.xlu0 0
      %2189 = vperm.xlu0 %2188, %v1471
      %v2190 = vpop.permute.xlu0 %2189
      %2193 = vset.pattern.permute.xlu0 0
      %2194 = vperm.xlu0 %2193, %v1488
      %v2195 = vpop.permute.xlu0 %2194
      %2198 = vset.pattern.permute.xlu0 0
      %2199 = vperm.xlu0 %2198, %v1489
      %v2200 = vpop.permute.xlu0 %2199
      %2203 = vset.pattern.permute.xlu0 0
      %2204 = vperm.xlu0 %2203, %v1490
      %v2205 = vpop.permute.xlu0 %2204
      %2208 = vset.pattern.permute.xlu0 0
      %2209 = vperm.xlu0 %2208, %v1491
      %v2210 = vpop.permute.xlu0 %2209
      %2213 = vset.pattern.permute.xlu0 0
      %2214 = vperm.xlu0 %2213, %v1492
      %v2215 = vpop.permute.xlu0 %2214
      %2218 = vset.pattern.permute.xlu0 0
      %2219 = vperm.xlu0 %2218, %v1493
      %v2220 = vpop.permute.xlu0 %2219
      %2223 = vset.pattern.permute.xlu0 0
      %2224 = vperm.xlu0 %2223, %v1494
      %v2225 = vpop.permute.xlu0 %2224
      %2228 = vset.pattern.permute.xlu0 0
      %2229 = vperm.xlu0 %2228, %v1495
      %v2230 = vpop.permute.xlu0 %2229
      %2233 = vset.pattern.permute.xlu0 0
      %2234 = vperm.xlu0 %2233, %v1496
      %v2235 = vpop.permute.xlu0 %2234
      %2238 = vset.pattern.permute.xlu0 0
      %2239 = vperm.xlu0 %2238, %v1497
      %v2240 = vpop.permute.xlu0 %2239
      %2243 = vset.pattern.permute.xlu0 0
      %2244 = vperm.xlu0 %2243, %v1498
      %v2245 = vpop.permute.xlu0 %2244
      %2248 = vset.pattern.permute.xlu0 0
      %2249 = vperm.xlu0 %2248, %v1499
      %v2250 = vpop.permute.xlu0 %2249
      %2253 = vset.pattern.permute.xlu0 0
      %2254 = vperm.xlu0 %2253, %v1500
      %v2255 = vpop.permute.xlu0 %2254
      %2258 = vset.pattern.permute.xlu0 0
      %2259 = vperm.xlu0 %2258, %v1501
      %v2260 = vpop.permute.xlu0 %2259
      %2263 = vset.pattern.permute.xlu0 0
      %2264 = vperm.xlu0 %2263, %v1502
      %v2265 = vpop.permute.xlu0 %2264
      %2268 = vset.pattern.permute.xlu0 0
      %2269 = vperm.xlu0 %2268, %v1503
      %v2270 = vpop.permute.xlu0 %2269
      %2273 = vset.pattern.permute.xlu0 0
      %2274 = vperm.xlu0 %2273, %v1520
      %v2275 = vpop.permute.xlu0 %2274
      %2278 = vset.pattern.permute.xlu0 0
      %2279 = vperm.xlu0 %2278, %v1521
      %v2280 = vpop.permute.xlu0 %2279
      %2283 = vset.pattern.permute.xlu0 0
      %2284 = vperm.xlu0 %2283, %v1522
      %v2285 = vpop.permute.xlu0 %2284
      %2288 = vset.pattern.permute.xlu0 0
      %2289 = vperm.xlu0 %2288, %v1523
      %v2290 = vpop.permute.xlu0 %2289
      %2293 = vset.pattern.permute.xlu0 0
      %2294 = vperm.xlu0 %2293, %v1524
      %v2295 = vpop.permute.xlu0 %2294
      %2298 = vset.pattern.permute.xlu0 0
      %2299 = vperm.xlu0 %2298, %v1525
      %v2300 = vpop.permute.xlu0 %2299
      %2303 = vset.pattern.permute.xlu0 0
      %2304 = vperm.xlu0 %2303, %v1526
      %v2305 = vpop.permute.xlu0 %2304
      %2308 = vset.pattern.permute.xlu0 0
      %2309 = vperm.xlu0 %2308, %v1527
      %v2310 = vpop.permute.xlu0 %2309
      %2313 = vset.pattern.permute.xlu0 0
      %2314 = vperm.xlu0 %2313, %v1528
      %v2315 = vpop.permute.xlu0 %2314
      %2318 = vset.pattern.permute.xlu0 0
      %2319 = vperm.xlu0 %2318, %v1529
      %v2320 = vpop.permute.xlu0 %2319
      %2323 = vset.pattern.permute.xlu0 0
      %2324 = vperm.xlu0 %2323, %v1530
      %v2325 = vpop.permute.xlu0 %2324
      %2328 = vset.pattern.permute.xlu0 0
      %2329 = vperm.xlu0 %2328, %v1531
      %v2330 = vpop.permute.xlu0 %2329
      %2333 = vset.pattern.permute.xlu0 0
      %2334 = vperm.xlu0 %2333, %v1532
      %v2335 = vpop.permute.xlu0 %2334
      %2338 = vset.pattern.permute.xlu0 0
      %2339 = vperm.xlu0 %2338, %v1533
      %v2340 = vpop.permute.xlu0 %2339
      %2343 = vset.pattern.permute.xlu0 0
      %2344 = vperm.xlu0 %2343, %v1534
      %v2345 = vpop.permute.xlu0 %2344
      %2348 = vset.pattern.permute.xlu0 0
      %2349 = vperm.xlu0 %2348, %v1535
      %v2350 = vpop.permute.xlu0 %2349
      %2353 = vset.pattern.permute.xlu0 0
      %2354 = vperm.xlu0 %2353, %v1552
      %v2355 = vpop.permute.xlu0 %2354
      %2358 = vset.pattern.permute.xlu0 0
      %2359 = vperm.xlu0 %2358, %v1553
      %v2360 = vpop.permute.xlu0 %2359
      %2363 = vset.pattern.permute.xlu0 0
      %2364 = vperm.xlu0 %2363, %v1554
      %v2365 = vpop.permute.xlu0 %2364
      %2368 = vset.pattern.permute.xlu0 0
      %2369 = vperm.xlu0 %2368, %v1555
      %v2370 = vpop.permute.xlu0 %2369
      %2373 = vset.pattern.permute.xlu0 0
      %2374 = vperm.xlu0 %2373, %v1556
      %v2375 = vpop.permute.xlu0 %2374
      %2378 = vset.pattern.permute.xlu0 0
      %2379 = vperm.xlu0 %2378, %v1557
      %v2380 = vpop.permute.xlu0 %2379
      %2383 = vset.pattern.permute.xlu0 0
      %2384 = vperm.xlu0 %2383, %v1558
      %v2385 = vpop.permute.xlu0 %2384
      %2388 = vset.pattern.permute.xlu0 0
      %2389 = vperm.xlu0 %2388, %v1559
      %v2390 = vpop.permute.xlu0 %2389
      %2393 = vset.pattern.permute.xlu0 0
      %2394 = vperm.xlu0 %2393, %v1560
      %v2395 = vpop.permute.xlu0 %2394
      %2398 = vset.pattern.permute.xlu0 0
      %2399 = vperm.xlu0 %2398, %v1561
      %v2400 = vpop.permute.xlu0 %2399
      %2403 = vset.pattern.permute.xlu0 0
      %2404 = vperm.xlu0 %2403, %v1562
      %v2405 = vpop.permute.xlu0 %2404
      %2408 = vset.pattern.permute.xlu0 0
      %2409 = vperm.xlu0 %2408, %v1563
      %v2410 = vpop.permute.xlu0 %2409
      %2413 = vset.pattern.permute.xlu0 0
      %2414 = vperm.xlu0 %2413, %v1564
      %v2415 = vpop.permute.xlu0 %2414
      %2418 = vset.pattern.permute.xlu0 0
      %2419 = vperm.xlu0 %2418, %v1565
      %v2420 = vpop.permute.xlu0 %2419
      %2423 = vset.pattern.permute.xlu0 0
      %2424 = vperm.xlu0 %2423, %v1566
      %v2425 = vpop.permute.xlu0 %2424
      %2428 = vset.pattern.permute.xlu0 0
      %2429 = vperm.xlu0 %2428, %v1567
      %v2430 = vpop.permute.xlu0 %2429
      %v2432 = vmul.f32 %v1568, %v1715
      %v2433 = vmul.f32 %v1569, %v1720
      %v2434 = vmul.f32 %v1570, %v1725
      %v2435 = vmul.f32 %v1571, %v1730
      %v2436 = vmul.f32 %v1572, %v1735
      %v2437 = vmul.f32 %v1573, %v1740
      %v2438 = vmul.f32 %v1574, %v1745
      %v2439 = vmul.f32 %v1575, %v1750
      %v2440 = vmul.f32 %v1576, %v1755
      %v2441 = vmul.f32 %v1577, %v1760
      %v2442 = vmul.f32 %v1578, %v1765
      %v2443 = vmul.f32 %v1579, %v1770
      %v2444 = vmul.f32 %v1580, %v1775
      %v2445 = vmul.f32 %v1581, %v1780
      %v2446 = vmul.f32 %v1582, %v1785
      %v2447 = vmul.f32 %v1583, %v1790
      %v2448 = vmul.f32 %v1584, %v1795
      %v2449 = vmul.f32 %v1585, %v1800
      %v2450 = vmul.f32 %v1586, %v1805
      %v2451 = vmul.f32 %v1587, %v1810
      %v2452 = vmul.f32 %v1588, %v1815
      %v2453 = vmul.f32 %v1589, %v1820
      %v2454 = vmul.f32 %v1590, %v1825
      %v2455 = vmul.f32 %v1591, %v1830
      %v2456 = vmul.f32 %v1592, %v1835
      %v2457 = vmul.f32 %v1593, %v1840
      %v2458 = vmul.f32 %v1594, %v1845
      %v2459 = vmul.f32 %v1595, %v1850
      %v2460 = vmul.f32 %v1596, %v1855
      %v2461 = vmul.f32 %v1597, %v1860
      %v2462 = vmul.f32 %v1598, %v1865
      %v2463 = vmul.f32 %v1599, %v1870
      %v2464 = vmul.f32 %v1600, %v1875
      %v2465 = vmul.f32 %v1601, %v1880
      %v2466 = vmul.f32 %v1602, %v1885
      %v2467 = vmul.f32 %v1603, %v1890
      %v2468 = vmul.f32 %v1604, %v1895
      %v2469 = vmul.f32 %v1605, %v1900
      %v2470 = vmul.f32 %v1606, %v1905
      %v2471 = vmul.f32 %v1607, %v1910
      %v2472 = vmul.f32 %v1608, %v1915
      %v2473 = vmul.f32 %v1609, %v1920
      %v2474 = vmul.f32 %v1610, %v1925
      %v2475 = vmul.f32 %v1611, %v1930
      %v2476 = vmul.f32 %v1612, %v1935
      %v2477 = vmul.f32 %v1613, %v1940
      %v2478 = vmul.f32 %v1614, %v1945
      %v2479 = vmul.f32 %v1615, %v1950
      %v2480 = vmul.f32 %v1616, %v1955
      %v2481 = vmul.f32 %v1617, %v1960
      %v2482 = vmul.f32 %v1618, %v1965
      %v2483 = vmul.f32 %v1619, %v1970
      %v2484 = vmul.f32 %v1620, %v1975
      %v2485 = vmul.f32 %v1621, %v1980
      %v2486 = vmul.f32 %v1622, %v1985
      %v2487 = vmul.f32 %v1623, %v1990
      %v2488 = vmul.f32 %v1624, %v1995
      %v2489 = vmul.f32 %v1625, %v2000
      %v2490 = vmul.f32 %v1626, %v2005
      %v2491 = vmul.f32 %v1627, %v2010
      %v2492 = vmul.f32 %v1628, %v2015
      %v2493 = vmul.f32 %v1629, %v2020
      %v2494 = vmul.f32 %v1630, %v2025
      %v2495 = vmul.f32 %v1631, %v2030
      %v2496 = vmul.f32 %v1632, %v2035
      %v2497 = vmul.f32 %v1633, %v2040
      %v2498 = vmul.f32 %v1634, %v2045
      %v2499 = vmul.f32 %v1635, %v2050
      %v2500 = vmul.f32 %v1636, %v2055
      %v2501 = vmul.f32 %v1637, %v2060
      %v2502 = vmul.f32 %v1638, %v2065
      %v2503 = vmul.f32 %v1639, %v2070
      %v2504 = vmul.f32 %v1640, %v2075
      %v2505 = vmul.f32 %v1641, %v2080
      %v2506 = vmul.f32 %v1642, %v2085
      %v2507 = vmul.f32 %v1643, %v2090
      %v2508 = vmul.f32 %v1644, %v2095
      %v2509 = vmul.f32 %v1645, %v2100
      %v2510 = vmul.f32 %v1646, %v2105
      %v2511 = vmul.f32 %v1647, %v2110
      %v2512 = vmul.f32 %v1648, %v2115
      %v2513 = vmul.f32 %v1649, %v2120
      %v2514 = vmul.f32 %v1650, %v2125
      %v2515 = vmul.f32 %v1651, %v2130
      %v2516 = vmul.f32 %v1652, %v2135
      %v2517 = vmul.f32 %v1653, %v2140
      %v2518 = vmul.f32 %v1654, %v2145
      %v2519 = vmul.f32 %v1655, %v2150
      %v2520 = vmul.f32 %v1656, %v2155
      %v2521 = vmul.f32 %v1657, %v2160
      %v2522 = vmul.f32 %v1658, %v2165
      %v2523 = vmul.f32 %v1659, %v2170
      %v2524 = vmul.f32 %v1660, %v2175
      %v2525 = vmul.f32 %v1661, %v2180
      %v2526 = vmul.f32 %v1662, %v2185
      %v2527 = vmul.f32 %v1663, %v2190
      %v2528 = vmul.f32 %v1664, %v2195
      %v2529 = vmul.f32 %v1665, %v2200
      %v2530 = vmul.f32 %v1666, %v2205
      %v2531 = vmul.f32 %v1667, %v2210
      %v2532 = vmul.f32 %v1668, %v2215
      %v2533 = vmul.f32 %v1669, %v2220
      %v2534 = vmul.f32 %v1670, %v2225
      %v2535 = vmul.f32 %v1671, %v2230
      %v2536 = vmul.f32 %v1672, %v2235
      %v2537 = vmul.f32 %v1673, %v2240
      %v2538 = vmul.f32 %v1674, %v2245
      %v2539 = vmul.f32 %v1675, %v2250
      %v2540 = vmul.f32 %v1676, %v2255
      %v2541 = vmul.f32 %v1677, %v2260
      %v2542 = vmul.f32 %v1678, %v2265
      %v2543 = vmul.f32 %v1679, %v2270
      %v2544 = vmul.f32 %v1680, %v2275
      %v2545 = vmul.f32 %v1681, %v2280
      %v2546 = vmul.f32 %v1682, %v2285
      %v2547 = vmul.f32 %v1683, %v2290
      %v2548 = vmul.f32 %v1684, %v2295
      %v2549 = vmul.f32 %v1685, %v2300
      %v2550 = vmul.f32 %v1686, %v2305
      %v2551 = vmul.f32 %v1687, %v2310
      %v2552 = vmul.f32 %v1688, %v2315
      %v2553 = vmul.f32 %v1689, %v2320
      %v2554 = vmul.f32 %v1690, %v2325
      %v2555 = vmul.f32 %v1691, %v2330
      %v2556 = vmul.f32 %v1692, %v2335
      %v2557 = vmul.f32 %v1693, %v2340
      %v2558 = vmul.f32 %v1694, %v2345
      %v2559 = vmul.f32 %v1695, %v2350
      %v2560 = vmul.f32 %v1696, %v2355
      %v2561 = vmul.f32 %v1697, %v2360
      %v2562 = vmul.f32 %v1698, %v2365
      %v2563 = vmul.f32 %v1699, %v2370
      %v2564 = vmul.f32 %v1700, %v2375
      %v2565 = vmul.f32 %v1701, %v2380
      %v2566 = vmul.f32 %v1702, %v2385
      %v2567 = vmul.f32 %v1703, %v2390
      %v2568 = vmul.f32 %v1704, %v2395
      %v2569 = vmul.f32 %v1705, %v2400
      %v2570 = vmul.f32 %v1706, %v2405
      %v2571 = vmul.f32 %v1707, %v2410
      %v2572 = vmul.f32 %v1708, %v2415
      %v2573 = vmul.f32 %v1709, %v2420
      %v2574 = vmul.f32 %v1710, %v2425
      %v2575 = vmul.f32 %v1711, %v2430
      %vm2576 = vcmask 400384
      %2577 = vst.msk [vmem:[%s240] sm:$0xff] %vm2576, %v2432
      %2578 = vst.msk [vmem:[%s240 + $0x8] sm:$0xff] %vm2576, %v2433
      %2579 = vst.msk [vmem:[%s240 + $0x10] sm:$0xff] %vm2576, %v2434
      %2580 = vst.msk [vmem:[%s240 + $0x18] sm:$0xff] %vm2576, %v2435
      %2581 = vst.msk [vmem:[%s240 + $0x20] sm:$0xff] %vm2576, %v2436
      %2582 = vst.msk [vmem:[%s240 + $0x28] sm:$0xff] %vm2576, %v2437
      %2583 = vst.msk [vmem:[%s240 + $0x30] sm:$0xff] %vm2576, %v2438
      %2584 = vst.msk [vmem:[%s240 + $0x38] sm:$0xff] %vm2576, %v2439
      %2585 = vst.msk [vmem:[%s240 + $0x40] sm:$0xff] %vm2576, %v2440
      %2586 = vst.msk [vmem:[%s240 + $0x48] sm:$0xff] %vm2576, %v2441
      %2587 = vst.msk [vmem:[%s240 + $0x50] sm:$0xff] %vm2576, %v2442
      %2588 = vst.msk [vmem:[%s240 + $0x58] sm:$0xff] %vm2576, %v2443
      %2589 = vst.msk [vmem:[%s240 + $0x60] sm:$0xff] %vm2576, %v2444
      %2590 = vst.msk [vmem:[%s240 + $0x68] sm:$0xff] %vm2576, %v2445
      %2591 = vst.msk [vmem:[%s240 + $0x70] sm:$0xff] %vm2576, %v2446
      %2592 = vst.msk [vmem:[%s240 + $0x78] sm:$0xff] %vm2576, %v2447
      %2593 = vst.msk [vmem:[%s240 + $0x80] sm:$0xff] %vm2576, %v2448
      %2594 = vst.msk [vmem:[%s240 + $0x88] sm:$0xff] %vm2576, %v2449
      %2595 = vst.msk [vmem:[%s240 + $0x90] sm:$0xff] %vm2576, %v2450
      %2596 = vst.msk [vmem:[%s240 + $0x98] sm:$0xff] %vm2576, %v2451
      %2597 = vst.msk [vmem:[%s240 + $0xa0] sm:$0xff] %vm2576, %v2452
      %2598 = vst.msk [vmem:[%s240 + $0xa8] sm:$0xff] %vm2576, %v2453
      %2599 = vst.msk [vmem:[%s240 + $0xb0] sm:$0xff] %vm2576, %v2454
      %2600 = vst.msk [vmem:[%s240 + $0xb8] sm:$0xff] %vm2576, %v2455
      %2601 = vst.msk [vmem:[%s240 + $0xc0] sm:$0xff] %vm2576, %v2456
      %2602 = vst.msk [vmem:[%s240 + $0xc8] sm:$0xff] %vm2576, %v2457
      %2603 = vst.msk [vmem:[%s240 + $0xd0] sm:$0xff] %vm2576, %v2458
      %2604 = vst.msk [vmem:[%s240 + $0xd8] sm:$0xff] %vm2576, %v2459
      %2605 = vst.msk [vmem:[%s240 + $0xe0] sm:$0xff] %vm2576, %v2460
      %2606 = vst.msk [vmem:[%s240 + $0xe8] sm:$0xff] %vm2576, %v2461
      %2607 = vst.msk [vmem:[%s240 + $0xf0] sm:$0xff] %vm2576, %v2462
      %2608 = vst.msk [vmem:[%s240 + $0xf8] sm:$0xff] %vm2576, %v2463
      %2609 = vst.msk [vmem:[%s240 + $0x100] sm:$0xff] %vm2576, %v2464
      %2610 = vst.msk [vmem:[%s240 + $0x108] sm:$0xff] %vm2576, %v2465
      %2611 = vst.msk [vmem:[%s240 + $0x110] sm:$0xff] %vm2576, %v2466
      %2612 = vst.msk [vmem:[%s240 + $0x118] sm:$0xff] %vm2576, %v2467
      %2613 = vst.msk [vmem:[%s240 + $0x120] sm:$0xff] %vm2576, %v2468
      %2614 = vst.msk [vmem:[%s240 + $0x128] sm:$0xff] %vm2576, %v2469
      %2615 = vst.msk [vmem:[%s240 + $0x130] sm:$0xff] %vm2576, %v2470
      %2616 = vst.msk [vmem:[%s240 + $0x138] sm:$0xff] %vm2576, %v2471
      %2617 = vst.msk [vmem:[%s240 + $0x140] sm:$0xff] %vm2576, %v2472
      %2618 = vst.msk [vmem:[%s240 + $0x148] sm:$0xff] %vm2576, %v2473
      %2619 = vst.msk [vmem:[%s240 + $0x150] sm:$0xff] %vm2576, %v2474
      %2620 = vst.msk [vmem:[%s240 + $0x158] sm:$0xff] %vm2576, %v2475
      %2621 = vst.msk [vmem:[%s240 + $0x160] sm:$0xff] %vm2576, %v2476
      %2622 = vst.msk [vmem:[%s240 + $0x168] sm:$0xff] %vm2576, %v2477
      %2623 = vst.msk [vmem:[%s240 + $0x170] sm:$0xff] %vm2576, %v2478
      %2624 = vst.msk [vmem:[%s240 + $0x178] sm:$0xff] %vm2576, %v2479
      %2625 = vst.msk [vmem:[%s240 + $0x180] sm:$0xff] %vm2576, %v2480
      %2626 = vst.msk [vmem:[%s240 + $0x188] sm:$0xff] %vm2576, %v2481
      %2627 = vst.msk [vmem:[%s240 + $0x190] sm:$0xff] %vm2576, %v2482
      %2628 = vst.msk [vmem:[%s240 + $0x198] sm:$0xff] %vm2576, %v2483
      %2629 = vst.msk [vmem:[%s240 + $0x1a0] sm:$0xff] %vm2576, %v2484
      %2630 = vst.msk [vmem:[%s240 + $0x1a8] sm:$0xff] %vm2576, %v2485
      %2631 = vst.msk [vmem:[%s240 + $0x1b0] sm:$0xff] %vm2576, %v2486
      %2632 = vst.msk [vmem:[%s240 + $0x1b8] sm:$0xff] %vm2576, %v2487
      %2633 = vst.msk [vmem:[%s240 + $0x1c0] sm:$0xff] %vm2576, %v2488
      %2634 = vst.msk [vmem:[%s240 + $0x1c8] sm:$0xff] %vm2576, %v2489
      %2635 = vst.msk [vmem:[%s240 + $0x1d0] sm:$0xff] %vm2576, %v2490
      %2636 = vst.msk [vmem:[%s240 + $0x1d8] sm:$0xff] %vm2576, %v2491
      %2637 = vst.msk [vmem:[%s240 + $0x1e0] sm:$0xff] %vm2576, %v2492
      %2638 = vst.msk [vmem:[%s240 + $0x1e8] sm:$0xff] %vm2576, %v2493
      %2639 = vst.msk [vmem:[%s240 + $0x1f0] sm:$0xff] %vm2576, %v2494
      %2640 = vst.msk [vmem:[%s240 + $0x1f8] sm:$0xff] %vm2576, %v2495
      %2641 = vst.msk [vmem:[%s240 + $0x200] sm:$0xff] %vm2576, %v2496
      %2642 = vst.msk [vmem:[%s240 + $0x208] sm:$0xff] %vm2576, %v2497
      %2643 = vst.msk [vmem:[%s240 + $0x210] sm:$0xff] %vm2576, %v2498
      %2644 = vst.msk [vmem:[%s240 + $0x218] sm:$0xff] %vm2576, %v2499
      %2645 = vst.msk [vmem:[%s240 + $0x220] sm:$0xff] %vm2576, %v2500
      %2646 = vst.msk [vmem:[%s240 + $0x228] sm:$0xff] %vm2576, %v2501
      %2647 = vst.msk [vmem:[%s240 + $0x230] sm:$0xff] %vm2576, %v2502
      %2648 = vst.msk [vmem:[%s240 + $0x238] sm:$0xff] %vm2576, %v2503
      %2649 = vst.msk [vmem:[%s240 + $0x240] sm:$0xff] %vm2576, %v2504
      %2650 = vst.msk [vmem:[%s240 + $0x248] sm:$0xff] %vm2576, %v2505
      %2651 = vst.msk [vmem:[%s240 + $0x250] sm:$0xff] %vm2576, %v2506
      %2652 = vst.msk [vmem:[%s240 + $0x258] sm:$0xff] %vm2576, %v2507
      %2653 = vst.msk [vmem:[%s240 + $0x260] sm:$0xff] %vm2576, %v2508
      %2654 = vst.msk [vmem:[%s240 + $0x268] sm:$0xff] %vm2576, %v2509
      %2655 = vst.msk [vmem:[%s240 + $0x270] sm:$0xff] %vm2576, %v2510
      %2656 = vst.msk [vmem:[%s240 + $0x278] sm:$0xff] %vm2576, %v2511
      %2657 = vst.msk [vmem:[%s240 + $0x280] sm:$0xff] %vm2576, %v2512
      %2658 = vst.msk [vmem:[%s240 + $0x288] sm:$0xff] %vm2576, %v2513
      %2659 = vst.msk [vmem:[%s240 + $0x290] sm:$0xff] %vm2576, %v2514
      %2660 = vst.msk [vmem:[%s240 + $0x298] sm:$0xff] %vm2576, %v2515
      %2661 = vst.msk [vmem:[%s240 + $0x2a0] sm:$0xff] %vm2576, %v2516
      %2662 = vst.msk [vmem:[%s240 + $0x2a8] sm:$0xff] %vm2576, %v2517
      %2663 = vst.msk [vmem:[%s240 + $0x2b0] sm:$0xff] %vm2576, %v2518
      %2664 = vst.msk [vmem:[%s240 + $0x2b8] sm:$0xff] %vm2576, %v2519
      %2665 = vst.msk [vmem:[%s240 + $0x2c0] sm:$0xff] %vm2576, %v2520
      %2666 = vst.msk [vmem:[%s240 + $0x2c8] sm:$0xff] %vm2576, %v2521
      %2667 = vst.msk [vmem:[%s240 + $0x2d0] sm:$0xff] %vm2576, %v2522
      %2668 = vst.msk [vmem:[%s240 + $0x2d8] sm:$0xff] %vm2576, %v2523
      %2669 = vst.msk [vmem:[%s240 + $0x2e0] sm:$0xff] %vm2576, %v2524
      %2670 = vst.msk [vmem:[%s240 + $0x2e8] sm:$0xff] %vm2576, %v2525
      %2671 = vst.msk [vmem:[%s240 + $0x2f0] sm:$0xff] %vm2576, %v2526
      %2672 = vst.msk [vmem:[%s240 + $0x2f8] sm:$0xff] %vm2576, %v2527
      %2673 = vst.msk [vmem:[%s240 + $0x300] sm:$0xff] %vm2576, %v2528
      %2674 = vst.msk [vmem:[%s240 + $0x308] sm:$0xff] %vm2576, %v2529
      %2675 = vst.msk [vmem:[%s240 + $0x310] sm:$0xff] %vm2576, %v2530
      %2676 = vst.msk [vmem:[%s240 + $0x318] sm:$0xff] %vm2576, %v2531
      %2677 = vst.msk [vmem:[%s240 + $0x320] sm:$0xff] %vm2576, %v2532
      %2678 = vst.msk [vmem:[%s240 + $0x328] sm:$0xff] %vm2576, %v2533
      %2679 = vst.msk [vmem:[%s240 + $0x330] sm:$0xff] %vm2576, %v2534
      %2680 = vst.msk [vmem:[%s240 + $0x338] sm:$0xff] %vm2576, %v2535
      %2681 = vst.msk [vmem:[%s240 + $0x340] sm:$0xff] %vm2576, %v2536
      %2682 = vst.msk [vmem:[%s240 + $0x348] sm:$0xff] %vm2576, %v2537
      %2683 = vst.msk [vmem:[%s240 + $0x350] sm:$0xff] %vm2576, %v2538
      %2684 = vst.msk [vmem:[%s240 + $0x358] sm:$0xff] %vm2576, %v2539
      %2685 = vst.msk [vmem:[%s240 + $0x360] sm:$0xff] %vm2576, %v2540
      %2686 = vst.msk [vmem:[%s240 + $0x368] sm:$0xff] %vm2576, %v2541
      %2687 = vst.msk [vmem:[%s240 + $0x370] sm:$0xff] %vm2576, %v2542
      %2688 = vst.msk [vmem:[%s240 + $0x378] sm:$0xff] %vm2576, %v2543
      %2689 = vst.msk [vmem:[%s240 + $0x380] sm:$0xff] %vm2576, %v2544
      %2690 = vst.msk [vmem:[%s240 + $0x388] sm:$0xff] %vm2576, %v2545
      %2691 = vst.msk [vmem:[%s240 + $0x390] sm:$0xff] %vm2576, %v2546
      %2692 = vst.msk [vmem:[%s240 + $0x398] sm:$0xff] %vm2576, %v2547
      %2693 = vst.msk [vmem:[%s240 + $0x3a0] sm:$0xff] %vm2576, %v2548
      %2694 = vst.msk [vmem:[%s240 + $0x3a8] sm:$0xff] %vm2576, %v2549
      %2695 = vst.msk [vmem:[%s240 + $0x3b0] sm:$0xff] %vm2576, %v2550
      %2696 = vst.msk [vmem:[%s240 + $0x3b8] sm:$0xff] %vm2576, %v2551
      %2697 = vst.msk [vmem:[%s240 + $0x3c0] sm:$0xff] %vm2576, %v2552
      %2698 = vst.msk [vmem:[%s240 + $0x3c8] sm:$0xff] %vm2576, %v2553
      %2699 = vst.msk [vmem:[%s240 + $0x3d0] sm:$0xff] %vm2576, %v2554
      %2700 = vst.msk [vmem:[%s240 + $0x3d8] sm:$0xff] %vm2576, %v2555
      %2701 = vst.msk [vmem:[%s240 + $0x3e0] sm:$0xff] %vm2576, %v2556
      %2702 = vst.msk [vmem:[%s240 + $0x3e8] sm:$0xff] %vm2576, %v2557
      %2703 = vst.msk [vmem:[%s240 + $0x3f0] sm:$0xff] %vm2576, %v2558
      %2704 = vst.msk [vmem:[%s240 + $0x3f8] sm:$0xff] %vm2576, %v2559
      %2705 = vst.msk [vmem:[%s240 + $0x400] sm:$0xff] %vm2576, %v2560
      %2706 = vst.msk [vmem:[%s240 + $0x408] sm:$0xff] %vm2576, %v2561
      %2707 = vst.msk [vmem:[%s240 + $0x410] sm:$0xff] %vm2576, %v2562
      %2708 = vst.msk [vmem:[%s240 + $0x418] sm:$0xff] %vm2576, %v2563
      %2709 = vst.msk [vmem:[%s240 + $0x420] sm:$0xff] %vm2576, %v2564
      %2710 = vst.msk [vmem:[%s240 + $0x428] sm:$0xff] %vm2576, %v2565
      %2711 = vst.msk [vmem:[%s240 + $0x430] sm:$0xff] %vm2576, %v2566
      %2712 = vst.msk [vmem:[%s240 + $0x438] sm:$0xff] %vm2576, %v2567
      %2713 = vst.msk [vmem:[%s240 + $0x440] sm:$0xff] %vm2576, %v2568
      %2714 = vst.msk [vmem:[%s240 + $0x448] sm:$0xff] %vm2576, %v2569
      %2715 = vst.msk [vmem:[%s240 + $0x450] sm:$0xff] %vm2576, %v2570
      %2716 = vst.msk [vmem:[%s240 + $0x458] sm:$0xff] %vm2576, %v2571
      %2717 = vst.msk [vmem:[%s240 + $0x460] sm:$0xff] %vm2576, %v2572
      %2718 = vst.msk [vmem:[%s240 + $0x468] sm:$0xff] %vm2576, %v2573
      %2719 = vst.msk [vmem:[%s240 + $0x470] sm:$0xff] %vm2576, %v2574
      %2720 = vst.msk [vmem:[%s240 + $0x478] sm:$0xff] %vm2576, %v2575
      %s2721 = smul.u32 144, %s15
      %p2722 = scmp.lt.s32.totalorder %s2721, 287
      %s2723 = scalar_select %p2722, %s2721, 287
      %s2724 = smul.addr %s2723, 8
      %s2725 = scalar_lea.vmem %s4, %s2724
      // Predicated region
      $region37: #{tpu_custom_call.1} parent=35 // pred_check
        %p2726 = pneg %p132
      $region38: #{tpu_custom_call.1} parent=35 // pred_check_branch
        %2728 = sbr.rel (%p2726) target = $region40
      $region39: #{tpu_custom_call.1} parent=35 // pred_region
        %s2729 = smul.u32 144, %s15
      $region40: #{tpu_custom_call.1} parent=35 // pred_fallthru
        _
    $region36: #{tpu_custom_call.1} parent=5 // pred_fallthru
      _
    %p2730 = scmp.le.s32.totalorder 2, %s10
    // Predicated region
    $region41: #{tpu_custom_call.1} parent=5 // pred_check
      %p2731 = pneg %p2730
    $region42: #{tpu_custom_call.1} parent=5 // pred_check_branch
      %2733 = sbr.rel (%p2731) target = $region44
    $region43: #{tpu_custom_call.1} parent=5 // pred_region
      %s2734 = ssub.s32 %s10, 2
      // Predicated region
      $region45: #{tpu_custom_call.1} parent=43 // pred_check
        %p2735 = pneg %p138
      $region46: #{tpu_custom_call.1} parent=43 // pred_check_branch
        %2737 = sbr.rel (%p2735) target = $region48
      $region47: #{tpu_custom_call.1} parent=43 // pred_region
        %s2738 = smul.u32 144, %s16
        %p2739 = scmp.lt.s32.totalorder %s2738, 287
        %s2740 = scalar_select %p2739, %s2738, 287
        %s2741 = smul.addr %s2740, 8
        %s2742 = scalar_lea.vmem %s4, %s2741
      $region48: #{tpu_custom_call.1} parent=43 // pred_fallthru
        _
    $region44: #{tpu_custom_call.1} parent=5 // pred_fallthru
      _
  $region6: #{tpu_custom_call.1} parent=0 // loop_footer
    %s14 = sadd.s32 1, %s10
  $region7: #{tpu_custom_call.1} parent=0 // loop_footer_branch
    %9 = sbr.rel target = $region3
  $region8: #{tpu_custom_call.1} parent=0 // loop_exit
    _

</llo_original>
